<compile_context>
chip_gen: v5e
topology: v5e:2x2
jax: 0.10.0
libtpu: 0.0.40
codegen_flags: <defaults>
</compile_context>

<pallas_src>
import functools

import jax
import jax.numpy as jnp
from jax.experimental import pallas as pl
from jax.experimental.pallas import tpu as pltpu

EPS = 1e-5


# ----------------------------------------------------------------------------
# Chip-aware VMEM budgeting (v5e/v6e: 128 MiB physical, v7x: 64 MiB)
# ----------------------------------------------------------------------------
def _vmem_capacity_bytes():
    try:
        info = pltpu.get_tpu_info()
        cap = getattr(info, "vmem_capacity_bytes", None)
        if cap:
            return int(cap)
    except Exception:
        pass
    return 64 * 1024 * 1024          # conservative fallback: v7x physical VMEM


def _conv_vmem_estimate(tile_h, wcin, wcout):
    in_b = 2 * tile_h * wcin * 4                       # center tile, dbl-buffered (f32 worst case)
    halo_b = 2 * 2 * 8 * wcin * 4                      # two 8-row halo blocks, dbl-buffered
    out_b = 2 * tile_h * wcout * 2 + 4 * wcout * 4     # bf16 y + f32 sums/ssqs
    w_b = 2 * 3 * wcin * wcout * 2                     # bf16 banded weights
    tmp_b = 5 * (tile_h + 2) * wcin * 2 + 2 * tile_h * wcout * 4   # in-kernel temporaries
    return in_b + halo_b + out_b + w_b + tmp_b


def _pick_tile_h(H, wcin, wcout, budget_bytes, row_cap=256):
    """Largest multiple-of-8 tile height dividing H that fits the VMEM budget."""
    if H % 8 != 0:
        return H                     # single full-H tile (block shape == array dims)
    best, th = 8, 8
    while th <= min(H, row_cap):
        if H % th == 0 and _conv_vmem_estimate(th, wcin, wcout) <= budget_bytes:
            best = th
        th += 8
    return best


def _pick_tile_rows(M, wc, budget_bytes, row_cap=2048):
    """Largest multiple-of-8 row tile dividing M for the streaming BN+ReLU pass."""
    if M % 8 != 0:
        return M
    best, tr = 8, 8
    while tr <= min(M, row_cap):
        if M % tr == 0 and 12 * tr * wc <= budget_bytes:
            best = tr
        tr += 8
    return best


# ----------------------------------------------------------------------------
# Host-side: fold the 3x3 conv's W-axis taps (and zero padding along W) into a
# banded (W*Cin, W*Cout) matrix per vertical tap dh.
# ----------------------------------------------------------------------------
def _banded_weights(w_hwio, W, dtype=jnp.bfloat16):
    KH, KW, Cin, Cout = w_hwio.shape
    cols = jnp.arange(W)
    bands = []
    for dh in range(KH):
        band = jnp.zeros((W * Cin, W * Cout), jnp.float32)
        for dw in range(KW):
            # input col c_in contributes to output col c_out iff c_in == c_out + dw - 1
            sel = (cols[:, None] == cols[None, :] + (dw - 1)).astype(jnp.float32)
            band = band + jnp.kron(sel, w_hwio[dh, dw].astype(jnp.float32))
        bands.append(band)
    return jnp.stack(bands, axis=0).astype(dtype)          # (3, W*Cin, W*Cout)


# ----------------------------------------------------------------------------
# Kernel 1: fused [optional input BN+ReLU] -> 3x3 conv -> per-tile channel stats
# ----------------------------------------------------------------------------
def _conv_bn_stats_kernel(x_ref, top_ref, bot_ref, w_ref, scale_ref, shift_ref,
                          y_ref, sums_ref, ssqs_ref, *, n_tiles, fuse_input_bn):
    # x_ref     : (1, tile_h, W*Cin)   center rows of the (raw) input activation
    # top_ref   : (1, halo, W*Cin)     halo block whose LAST row is row r0-1
    # bot_ref   : (1, halo, W*Cin)     halo block whose FIRST row is row r0+tile_h
    # w_ref     : (3, W*Cin, W*Cout)   banded conv weights (bf16)
    # scale_ref : (1, W*Cin)           fused input-BN scale (unused if not fused)
    # shift_ref : (1, W*Cin)           fused input-BN shift
    # y_ref     : (1, tile_h, W*Cout)  raw conv output (bf16, lane-dense)
    # sums_ref  : (1, 1, W*Cout)       per-tile channel sums (folded over W on host)
    # ssqs_ref  : (1, 1, W*Cout)       per-tile channel sum-of-squares
    t = pl.program_id(1)
    tile_h = x_ref.shape[1]
    hr = top_ref.shape[1]

    def prep(rows):                   # -> normalized bf16 rows (single cast)
        rows = rows.astype(jnp.float32)
        if fuse_input_bn:             # fused BN-affine + ReLU of the previous block
            rows = jnp.maximum(rows * scale_ref[...] + shift_ref[...], 0.0)
        return rows.astype(jnp.bfloat16)

    xc = prep(x_ref[0])                                        # (tile_h, W*Cin)
    top = prep(top_ref[0, hr - 1:hr, :])                       # (1, W*Cin)
    bot = prep(bot_ref[0, 0:1, :])                             # (1, W*Cin)
    # Image-boundary rows become zeros == conv zero padding along H (applied
    # AFTER the fused BN+ReLU, matching PyTorch: padding is on this conv's input).
    top = jnp.where(t > 0, top, jnp.zeros_like(top))
    bot = jnp.where(t < n_tiles - 1, bot, jnp.zeros_like(bot))

    p = jnp.concatenate([top, xc, bot], axis=0)                # (tile_h+2, W*Cin) bf16

    # 3 deep MXU matmuls (K = W*Cin), bf16 operands, f32 accumulation.
    acc = jnp.dot(p[0:tile_h], w_ref[0], preferred_element_type=jnp.float32)
    acc = acc + jnp.dot(p[1:tile_h + 1], w_ref[1], preferred_element_type=jnp.float32)
    acc = acc + jnp.dot(p[2:tile_h + 2], w_ref[2], preferred_element_type=jnp.float32)

    # Fused statistics epilogue (avoids a second HBM pass over the activation).
    sums_ref[0] = jnp.sum(acc, axis=0, keepdims=True)
    ssqs_ref[0] = jnp.sum(acc * acc, axis=0, keepdims=True)

    y_ref[0] = acc.astype(y_ref.dtype)


def conv_bn_stats_pallas(x_flat, w_band, scale_row, shift_row, *,
                         tile_h, fuse_input_bn, vmem_limit_bytes):
    N, H, WCin = x_flat.shape
    _, _, WCout = w_band.shape
    assert H % tile_h == 0
    n_tiles = H // tile_h
    halo = 8 if (H % 8 == 0) else H

    if n_tiles == 1:
        top_map = lambda n, t: (n, 0, 0)      # unused rows; masked to zero in-kernel
        bot_map = lambda n, t: (n, 0, 0)
    else:
        th8 = tile_h // 8
        nh8 = H // 8
        top_map = lambda n, t: (n, jnp.maximum(t * th8 - 1, 0), 0)
        bot_map = lambda n, t: (n, jnp.minimum((t + 1) * th8, nh8 - 1), 0)

    kernel = functools.partial(_conv_bn_stats_kernel,
                               n_tiles=n_tiles, fuse_input_bn=fuse_input_bn)

    y, sums, ssqs = pl.pallas_call(
        kernel,
        out_shape=(
            jax.ShapeDtypeStruct((N, H, WCout), jnp.bfloat16),   # inter-block act in bf16
            jax.ShapeDtypeStruct((N * n_tiles, 1, WCout), jnp.float32),
            jax.ShapeDtypeStruct((N * n_tiles, 1, WCout), jnp.float32),
        ),
        grid=(N, n_tiles),
        in_specs=[
            pl.BlockSpec((1, tile_h, WCin), lambda n, t: (n, t, 0)),
            pl.BlockSpec((1, halo, WCin), top_map),
            pl.BlockSpec((1, halo, WCin), bot_map),
            pl.BlockSpec((3, WCin, WCout), lambda n, t: (0, 0, 0)),
            pl.BlockSpec((1, WCin), lambda n, t: (0, 0)),
            pl.BlockSpec((1, WCin), lambda n, t: (0, 0)),
        ],
        out_specs=(
            pl.BlockSpec((1, tile_h, WCout), lambda n, t: (n, t, 0)),
            pl.BlockSpec((1, 1, WCout), lambda n, t: (n * n_tiles + t, 0, 0)),
            pl.BlockSpec((1, 1, WCout), lambda n, t: (n * n_tiles + t, 0, 0)),
        ),
        compiler_params=pltpu.CompilerParams(
            dimension_semantics=("parallel", "parallel"),
            vmem_limit_bytes=vmem_limit_bytes),
    )(x_flat, x_flat, x_flat, w_band, scale_row, shift_row)
    return y, sums, ssqs


# ----------------------------------------------------------------------------
# Kernel 2: final BatchNorm affine + ReLU (lane-dense, large row tiles)
# ----------------------------------------------------------------------------
def _bn_relu_kernel(y_ref, scale_ref, shift_ref, o_ref):
    y = y_ref[...].astype(jnp.float32)
    o_ref[...] = jnp.maximum(y * scale_ref[...] + shift_ref[...], 0.0)


def bn_relu_pallas(y_flat, scale_row, shift_row, *, tile_rows):
    M, WC = y_flat.shape
    assert M % tile_rows == 0
    return pl.pallas_call(
        _bn_relu_kernel,
        out_shape=jax.ShapeDtypeStruct((M, WC), jnp.float32),
        grid=(M // tile_rows,),
        in_specs=[
            pl.BlockSpec((tile_rows, WC), lambda i: (i, 0)),
            pl.BlockSpec((1, WC), lambda i: (0, 0)),
            pl.BlockSpec((1, WC), lambda i: (0, 0)),
        ],
        out_specs=pl.BlockSpec((tile_rows, WC), lambda i: (i, 0)),
        compiler_params=pltpu.CompilerParams(
            dimension_semantics=("parallel",)),
    )(y_flat, scale_row, shift_row)


# ----------------------------------------------------------------------------
# Full DoubleConv forward (NCHW in -> NCHW out, PyTorch parity)
# BatchNorm uses batch statistics (biased variance), i.e. training-mode forward.
# NOTE: conv biases are cancelled exactly by batch-stats BN, so they are dropped
#       in the kernels (this would NOT hold in eval mode with running stats).
# ----------------------------------------------------------------------------
def double_conv(x_nchw, params):
    N, Cin, H, W = x_nchw.shape
    C1 = params["w1"].shape[-1]
    C2 = params["w2"].shape[-1]
    M = N * H * W

    cap = _vmem_capacity_bytes()
    vmem_limit = int(min(cap * 0.55, 96 * 1024 * 1024))   # chip-conditional limit
    budget = int(vmem_limit * 0.75)                        # headroom for temporaries

    # NCHW -> lane-dense (N, H, W*C) rows for the kernels (entry/exit layout only).
    x_flat = jnp.transpose(x_nchw, (0, 2, 3, 1)).reshape(N, H, W * Cin)

    w1_band = _banded_weights(params["w1"], W)             # (3, W*Cin, W*C1) bf16
    w2_band = _banded_weights(params["w2"], W)             # (3, W*C1,  W*C2) bf16

    tile_h1 = _pick_tile_h(H, W * Cin, W * C1, budget)
    tile_h2 = _pick_tile_h(H, W * C1, W * C2, budget)

    dummy = jnp.zeros((1, W * Cin), jnp.float32)

    # ---- block 1: conv1 + fused per-channel stats (single pass over x / y1)
    y1, s1, q1 = conv_bn_stats_pallas(x_flat, w1_band, dummy, dummy,
                                      tile_h=tile_h1, fuse_input_bn=False,
                                      vmem_limit_bytes=vmem_limit)
    mean1 = s1.reshape(-1, W, C1).sum(axis=(0, 1)) / M
    var1 = q1.reshape(-1, W, C1).sum(axis=(0, 1)) / M - mean1 * mean1
    scale1 = params["g1"] * jax.lax.rsqrt(var1 + EPS)
    shift1 = params["be1"] - mean1 * scale1

    # ---- block 2: BN1 + ReLU fused into conv2's input stage, + fused stats
    y2, s2, q2 = conv_bn_stats_pallas(
        y1, w2_band,
        jnp.tile(scale1.reshape(1, C1), (1, W)),
        jnp.tile(shift1.reshape(1, C1), (1, W)),
        tile_h=tile_h2, fuse_input_bn=True,
        vmem_limit_bytes=vmem_limit)
    mean2 = s2.reshape(-1, W, C2).sum(axis=(0, 1)) / M
    var2 = q2.reshape(-1, W, C2).sum(axis=(0, 1)) / M - mean2 * mean2
    scale2 = params["g2"] * jax.lax.rsqrt(var2 + EPS)
    shift2 = params["be2"] - mean2 * scale2

    # ---- final BN2 + ReLU: one tiled, lane-dense streaming pass
    tile_rows = _pick_tile_rows(N * H, W * C2, budget)
    out_flat = bn_relu_pallas(
        y2.reshape(N * H, W * C2),
        jnp.tile(scale2.reshape(1, C2), (1, W)),
        jnp.tile(shift2.reshape(1, C2), (1, W)),
        tile_rows=tile_rows)

    out = out_flat.reshape(N, H, W, C2)
    # TODO(synk): if the downstream U-Net op can consume NHWC / lane-dense layout,
    #             drop this transpose (it is an extra full HBM read+write).
    return jnp.transpose(out, (0, 3, 1, 2))


# ----------------------------------------------------------------------------
# Pure-JAX reference (true module semantics, f32, with conv biases)
# ----------------------------------------------------------------------------
def reference_double_conv(x_nchw, params):
    def block(x, w, b, g, be):
        y = jax.lax.conv_general_dilated(
            x, w, window_strides=(1, 1), padding="SAME",
            dimension_numbers=("NHWC", "HWIO", "NHWC")) + b
        mean = jnp.mean(y, axis=(0, 1, 2))
        var = jnp.var(y, axis=(0, 1, 2))
        return jnp.maximum((y - mean) / jnp.sqrt(var + EPS) * g + be, 0.0)

    x = jnp.transpose(x_nchw, (0, 2, 3, 1))
    y = block(x, params["w1"], params["b1"], params["g1"], params["be1"])
    y = block(y, params["w2"], params["b2"], params["g2"], params["be2"])
    return jnp.transpose(y, (0, 3, 1, 2))


# ----------------------------------------------------------------------------
# Deterministic parameter init (shapes from DoubleConv(in_channels, out_channels))
# ----------------------------------------------------------------------------
def init_params(key, in_channels, out_channels):
    k1, k2, k3, k4 = jax.random.split(key, 4)
    return {
        "w1": 0.1 * jax.random.normal(k1, (3, 3, in_channels, out_channels), jnp.float32),
        "b1": 0.1 * jax.random.normal(k2, (out_channels,), jnp.float32),
        "g1": jnp.ones((out_channels,), jnp.float32),
        "be1": jnp.zeros((out_channels,), jnp.float32),
        "w2": 0.1 * jax.random.normal(k3, (3, 3, out_channels, out_channels), jnp.float32),
        "b2": 0.1 * jax.random.normal(k4, (out_channels,), jnp.float32),
        "g2": jnp.ones((out_channels,), jnp.float32),
        "be2": jnp.zeros((out_channels,), jnp.float32),
    }


if __name__ == "__main__":
    key = jax.random.PRNGKey(0)
    kx, kp = jax.random.split(key)

    N, Cin, Cout, H, W = 2, 4, 8, 16, 16
    x = jax.random.normal(kx, (N, Cin, H, W), jnp.float32)   # NCHW, like PyTorch
    params = init_params(kp, Cin, Cout)

    out = jax.block_until_ready(jax.jit(double_conv)(x, params))
    ref = reference_double_conv(x, params)

    assert out.shape == (N, Cout, H, W), out.shape
    max_err = float(jnp.max(jnp.abs(out - ref)))
    assert max_err < 5e-2, f"mismatch vs reference: {max_err}"

    print("KERNEL_OK")
</pallas_src>

<mosaic_0001>
module attributes {stable_mosaic.version = 11 : i64} {
  func.func @_conv_bn_stats_kernel(%arg0: i32, %arg1: i32, %arg2: memref<1x16x64xf32, #tpu.memory_space<vmem>>, %arg3: memref<1x8x64xf32, #tpu.memory_space<vmem>>, %arg4: memref<1x8x64xf32, #tpu.memory_space<vmem>>, %arg5: memref<3x64x128xbf16, #tpu.memory_space<vmem>>, %arg6: memref<1x64xf32, #tpu.memory_space<vmem>>, %arg7: memref<1x64xf32, #tpu.memory_space<vmem>>, %arg8: memref<1x16x128xbf16, #tpu.memory_space<vmem>>, %arg9: memref<1x1x128xf32, #tpu.memory_space<vmem>>, %arg10: memref<1x1x128xf32, #tpu.memory_space<vmem>>) attributes {dimension_semantics = [#tpu.dimension_semantics<parallel>, #tpu.dimension_semantics<parallel>], iteration_bounds = array<i64: 2, 1>, scalar_prefetch = 0 : i64, scratch_operands = 0 : i64, tpu.core_type = #tpu.core_type<tc>, window_params = [{transform_indices = @transform_0, window_bounds = array<i64: 1, 16, 64>}, {transform_indices = @transform_1, window_bounds = array<i64: 1, 8, 64>}, {transform_indices = @transform_2, window_bounds = array<i64: 1, 8, 64>}, {pipeline_mode = #tpu.pipeline_mode<synchronous>, transform_indices = @transform_3, window_bounds = array<i64: 3, 64, 128>}, {pipeline_mode = #tpu.pipeline_mode<synchronous>, transform_indices = @transform_4, window_bounds = array<i64: 1, 64>}, {pipeline_mode = #tpu.pipeline_mode<synchronous>, transform_indices = @transform_5, window_bounds = array<i64: 1, 64>}, {transform_indices = @transform_6, window_bounds = array<i64: 1, 16, 128>}, {transform_indices = @transform_7, window_bounds = array<i64: 1, 1, 128>}, {transform_indices = @transform_8, window_bounds = array<i64: 1, 1, 128>}]} {
    %c0 = arith.constant 0 : index
    %c0_0 = arith.constant 0 : index
    %c0_1 = arith.constant 0 : index
    %0 = vector.load %arg2[%c0, %c0_0, %c0_1] : memref<1x16x64xf32, #tpu.memory_space<vmem>>, vector<1x16x64xf32>
    %1 = vector.shape_cast %0 : vector<1x16x64xf32> to vector<16x64xf32>
    %2 = arith.truncf %1 : vector<16x64xf32> to vector<16x64xbf16>
    %c0_2 = arith.constant 0 : index
    %c7 = arith.constant 7 : index
    %c0_3 = arith.constant 0 : index
    %3 = vector.load %arg3[%c0_2, %c7, %c0_3] : memref<1x8x64xf32, #tpu.memory_space<vmem>>, vector<1x1x64xf32>
    %4 = vector.shape_cast %3 : vector<1x1x64xf32> to vector<1x64xf32>
    %5 = arith.truncf %4 : vector<1x64xf32> to vector<1x64xbf16>
    %c0_4 = arith.constant 0 : index
    %c0_5 = arith.constant 0 : index
    %c0_6 = arith.constant 0 : index
    %6 = vector.load %arg4[%c0_4, %c0_5, %c0_6] : memref<1x8x64xf32, #tpu.memory_space<vmem>>, vector<1x1x64xf32>
    %7 = vector.shape_cast %6 : vector<1x1x64xf32> to vector<1x64xf32>
    %8 = arith.truncf %7 : vector<1x64xf32> to vector<1x64xbf16>
    %c0_i32 = arith.constant 0 : i32
    %9 = arith.cmpi sgt, %arg1, %c0_i32 : i32
    %cst = arith.constant 0.000000e+00 : bf16
    %10 = vector.broadcast %cst : bf16 to vector<1x64xbf16>
    %11 = arith.select %9, %5, %10 : vector<1x64xbf16>
    %c0_i32_7 = arith.constant 0 : i32
    %12 = arith.cmpi slt, %arg1, %c0_i32_7 : i32
    %cst_8 = arith.constant 0.000000e+00 : bf16
    %13 = vector.broadcast %cst_8 : bf16 to vector<1x64xbf16>
    %14 = arith.select %12, %8, %13 : vector<1x64xbf16>
    %15 = tpu.concatenate %11, %2, %14 in 0 : vector<1x64xbf16>, vector<16x64xbf16>, vector<1x64xbf16> -> vector<18x64xbf16>
    %16 = vector.extract_strided_slice %15 {offsets = [0, 0], sizes = [16, 64], strides = [1, 1]} : vector<18x64xbf16> to vector<16x64xbf16>
    %c0_9 = arith.constant 0 : index
    %c0_10 = arith.constant 0 : index
    %c0_11 = arith.constant 0 : index
    %17 = vector.load %arg5[%c0_9, %c0_10, %c0_11] : memref<3x64x128xbf16, #tpu.memory_space<vmem>>, vector<1x64x128xbf16>
    %18 = vector.shape_cast %17 : vector<1x64x128xbf16> to vector<64x128xbf16>
    %cst_12 = arith.constant dense<0.000000e+00> : vector<16x128xf32>
    %19 = tpu.matmul %16, %18, %cst_12 {dimension_numbers = #tpu.dot_dimension_numbers<[1], [0], [0], [1], [0, 0, 1, 1], [], []>} : vector<16x64xbf16>, vector<64x128xbf16>, vector<16x128xf32> -> vector<16x128xf32>
    %20 = vector.extract_strided_slice %15 {offsets = [1, 0], sizes = [16, 64], strides = [1, 1]} : vector<18x64xbf16> to vector<16x64xbf16>
    %c1 = arith.constant 1 : index
    %c0_13 = arith.constant 0 : index
    %c0_14 = arith.constant 0 : index
    %21 = vector.load %arg5[%c1, %c0_13, %c0_14] : memref<3x64x128xbf16, #tpu.memory_space<vmem>>, vector<1x64x128xbf16>
    %22 = vector.shape_cast %21 : vector<1x64x128xbf16> to vector<64x128xbf16>
    %cst_15 = arith.constant dense<0.000000e+00> : vector<16x128xf32>
    %23 = tpu.matmul %20, %22, %cst_15 {dimension_numbers = #tpu.dot_dimension_numbers<[1], [0], [0], [1], [0, 0, 1, 1], [], []>} : vector<16x64xbf16>, vector<64x128xbf16>, vector<16x128xf32> -> vector<16x128xf32>
    %24 = arith.addf %19, %23 : vector<16x128xf32>
    %25 = vector.extract_strided_slice %15 {offsets = [2, 0], sizes = [16, 64], strides = [1, 1]} : vector<18x64xbf16> to vector<16x64xbf16>
    %c2 = arith.constant 2 : index
    %c0_16 = arith.constant 0 : index
    %c0_17 = arith.constant 0 : index
    %26 = vector.load %arg5[%c2, %c0_16, %c0_17] : memref<3x64x128xbf16, #tpu.memory_space<vmem>>, vector<1x64x128xbf16>
    %27 = vector.shape_cast %26 : vector<1x64x128xbf16> to vector<64x128xbf16>
    %cst_18 = arith.constant dense<0.000000e+00> : vector<16x128xf32>
    %28 = tpu.matmul %25, %27, %cst_18 {dimension_numbers = #tpu.dot_dimension_numbers<[1], [0], [0], [1], [0, 0, 1, 1], [], []>} : vector<16x64xbf16>, vector<64x128xbf16>, vector<16x128xf32> -> vector<16x128xf32>
    %29 = arith.addf %24, %28 : vector<16x128xf32>
    %cst_19 = arith.constant dense<0.000000e+00> : vector<128xf32>
    %30 = vector.multi_reduction <add>, %29, %cst_19 [0] : vector<16x128xf32> to vector<128xf32>
    %31 = vector.shape_cast %30 : vector<128xf32> to vector<1x128xf32>
    %c0_20 = arith.constant 0 : index
    %c0_21 = arith.constant 0 : index
    %c0_22 = arith.constant 0 : index
    %32 = vector.load %arg9[%c0_20, %c0_21, %c0_22] : memref<1x1x128xf32, #tpu.memory_space<vmem>>, vector<1x1x128xf32>
    %33 = vector.shape_cast %32 : vector<1x1x128xf32> to vector<1x128xf32>
    %34 = vector.shape_cast %31 : vector<1x128xf32> to vector<1x1x128xf32>
    tpu.vector_store %arg9[%c0_20, %c0_21, %c0_22], %34 {strides = array<i32>} : memref<1x1x128xf32, #tpu.memory_space<vmem>>, vector<1x1x128xf32>,
    %35 = arith.mulf %29, %29 : vector<16x128xf32>
    %cst_23 = arith.constant dense<0.000000e+00> : vector<128xf32>
    %36 = vector.multi_reduction <add>, %35, %cst_23 [0] : vector<16x128xf32> to vector<128xf32>
    %37 = vector.shape_cast %36 : vector<128xf32> to vector<1x128xf32>
    %c0_24 = arith.constant 0 : index
    %c0_25 = arith.constant 0 : index
    %c0_26 = arith.constant 0 : index
    %38 = vector.load %arg10[%c0_24, %c0_25, %c0_26] : memref<1x1x128xf32, #tpu.memory_space<vmem>>, vector<1x1x128xf32>
    %39 = vector.shape_cast %38 : vector<1x1x128xf32> to vector<1x128xf32>
    %40 = vector.shape_cast %37 : vector<1x128xf32> to vector<1x1x128xf32>
    tpu.vector_store %arg10[%c0_24, %c0_25, %c0_26], %40 {strides = array<i32>} : memref<1x1x128xf32, #tpu.memory_space<vmem>>, vector<1x1x128xf32>,
    %41 = arith.truncf %29 : vector<16x128xf32> to vector<16x128xbf16>
    %c0_27 = arith.constant 0 : index
    %c0_28 = arith.constant 0 : index
    %c0_29 = arith.constant 0 : index
    %42 = vector.load %arg8[%c0_27, %c0_28, %c0_29] : memref<1x16x128xbf16, #tpu.memory_space<vmem>>, vector<1x16x128xbf16>
    %43 = vector.shape_cast %42 : vector<1x16x128xbf16> to vector<16x128xbf16>
    %44 = vector.shape_cast %41 : vector<16x128xbf16> to vector<1x16x128xbf16>
    tpu.vector_store %arg8[%c0_27, %c0_28, %c0_29], %44 {strides = array<i32>} : memref<1x16x128xbf16, #tpu.memory_space<vmem>>, vector<1x16x128xbf16>,
    return
  }
  func.func @transform_0(%arg0: i32, %arg1: i32) -> (i32, i32, i32) {
    %c0_i32 = arith.constant 0 : i32
    %c0_i32_0 = arith.constant 0 : i32
    return %arg0, %arg1, %c0_i32 : i32, i32, i32
  }
  func.func @transform_1(%arg0: i32, %arg1: i32) -> (i32, i32, i32) {
    %c0_i32 = arith.constant 0 : i32
    %c0_i32_0 = arith.constant 0 : i32
    %c0_i32_1 = arith.constant 0 : i32
    return %arg0, %c0_i32, %c0_i32_0 : i32, i32, i32
  }
  func.func @transform_2(%arg0: i32, %arg1: i32) -> (i32, i32, i32) {
    %c0_i32 = arith.constant 0 : i32
    %c0_i32_0 = arith.constant 0 : i32
    %c0_i32_1 = arith.constant 0 : i32
    return %arg0, %c0_i32, %c0_i32_0 : i32, i32, i32
  }
  func.func @transform_3(%arg0: i32, %arg1: i32) -> (i32, i32, i32) {
    %c0_i32 = arith.constant 0 : i32
    %c0_i32_0 = arith.constant 0 : i32
    %c0_i32_1 = arith.constant 0 : i32
    %c0_i32_2 = arith.constant 0 : i32
    return %c0_i32, %c0_i32_0, %c0_i32_1 : i32, i32, i32
  }
  func.func @transform_4(%arg0: i32, %arg1: i32) -> (i32, i32) {
    %c0_i32 = arith.constant 0 : i32
    %c0_i32_0 = arith.constant 0 : i32
    %c0_i32_1 = arith.constant 0 : i32
    return %c0_i32, %c0_i32_0 : i32, i32
  }
  func.func @transform_5(%arg0: i32, %arg1: i32) -> (i32, i32) {
    %c0_i32 = arith.constant 0 : i32
    %c0_i32_0 = arith.constant 0 : i32
    %c0_i32_1 = arith.constant 0 : i32
    return %c0_i32, %c0_i32_0 : i32, i32
  }
  func.func @transform_6(%arg0: i32, %arg1: i32) -> (i32, i32, i32) {
    %c0_i32 = arith.constant 0 : i32
    %c0_i32_0 = arith.constant 0 : i32
    return %arg0, %arg1, %c0_i32 : i32, i32, i32
  }
  func.func @transform_7(%arg0: i32, %arg1: i32) -> (i32, i32, i32) {
    %c1_i32 = arith.constant 1 : i32
    %0 = arith.muli %arg0, %c1_i32 : i32
    %1 = arith.addi %0, %arg1 : i32
    %c0_i32 = arith.constant 0 : i32
    %c0_i32_0 = arith.constant 0 : i32
    %c0_i32_1 = arith.constant 0 : i32
    return %1, %c0_i32, %c0_i32_0 : i32, i32, i32
  }
  func.func @transform_8(%arg0: i32, %arg1: i32) -> (i32, i32, i32) {
    %c1_i32 = arith.constant 1 : i32
    %0 = arith.muli %arg0, %c1_i32 : i32
    %1 = arith.addi %0, %arg1 : i32
    %c0_i32 = arith.constant 0 : i32
    %c0_i32_0 = arith.constant 0 : i32
    %c0_i32_1 = arith.constant 0 : i32
    return %1, %c0_i32, %c0_i32_0 : i32, i32, i32
  }
}

module attributes {stable_mosaic.version = 11 : i64} {
  func.func @_conv_bn_stats_kernel(%arg0: i32, %arg1: i32, %arg2: memref<1x16x128xbf16, #tpu.memory_space<vmem>>, %arg3: memref<1x8x128xbf16, #tpu.memory_space<vmem>>, %arg4: memref<1x8x128xbf16, #tpu.memory_space<vmem>>, %arg5: memref<3x128x128xbf16, #tpu.memory_space<vmem>>, %arg6: memref<1x128xf32, #tpu.memory_space<vmem>>, %arg7: memref<1x128xf32, #tpu.memory_space<vmem>>, %arg8: memref<1x16x128xbf16, #tpu.memory_space<vmem>>, %arg9: memref<1x1x128xf32, #tpu.memory_space<vmem>>, %arg10: memref<1x1x128xf32, #tpu.memory_space<vmem>>) attributes {dimension_semantics = [#tpu.dimension_semantics<parallel>, #tpu.dimension_semantics<parallel>], iteration_bounds = array<i64: 2, 1>, scalar_prefetch = 0 : i64, scratch_operands = 0 : i64, tpu.core_type = #tpu.core_type<tc>, window_params = [{transform_indices = @transform_0, window_bounds = array<i64: 1, 16, 128>}, {transform_indices = @transform_1, window_bounds = array<i64: 1, 8, 128>}, {transform_indices = @transform_2, window_bounds = array<i64: 1, 8, 128>}, {pipeline_mode = #tpu.pipeline_mode<synchronous>, transform_indices = @transform_3, window_bounds = array<i64: 3, 128, 128>}, {pipeline_mode = #tpu.pipeline_mode<synchronous>, transform_indices = @transform_4, window_bounds = array<i64: 1, 128>}, {pipeline_mode = #tpu.pipeline_mode<synchronous>, transform_indices = @transform_5, window_bounds = array<i64: 1, 128>}, {transform_indices = @transform_6, window_bounds = array<i64: 1, 16, 128>}, {transform_indices = @transform_7, window_bounds = array<i64: 1, 1, 128>}, {transform_indices = @transform_8, window_bounds = array<i64: 1, 1, 128>}]} {
    %c0 = arith.constant 0 : index
    %c0_0 = arith.constant 0 : index
    %c0_1 = arith.constant 0 : index
    %0 = vector.load %arg2[%c0, %c0_0, %c0_1] : memref<1x16x128xbf16, #tpu.memory_space<vmem>>, vector<1x16x128xbf16>
    %1 = vector.shape_cast %0 : vector<1x16x128xbf16> to vector<16x128xbf16>
    %2 = arith.extf %1 : vector<16x128xbf16> to vector<16x128xf32>
    %c0_2 = arith.constant 0 : index
    %c0_3 = arith.constant 0 : index
    %3 = vector.load %arg6[%c0_2, %c0_3] : memref<1x128xf32, #tpu.memory_space<vmem>>, vector<1x128xf32>
    %4 = vector.broadcast %3 : vector<1x128xf32> to vector<16x128xf32>
    %5 = arith.mulf %2, %4 : vector<16x128xf32>
    %c0_4 = arith.constant 0 : index
    %c0_5 = arith.constant 0 : index
    %6 = vector.load %arg7[%c0_4, %c0_5] : memref<1x128xf32, #tpu.memory_space<vmem>>, vector<1x128xf32>
    %7 = vector.broadcast %6 : vector<1x128xf32> to vector<16x128xf32>
    %8 = arith.addf %5, %7 : vector<16x128xf32>
    %cst = arith.constant 0.000000e+00 : f32
    %9 = vector.broadcast %cst : f32 to vector<16x128xf32>
    %10 = arith.maximumf %8, %9 : vector<16x128xf32>
    %11 = arith.truncf %10 : vector<16x128xf32> to vector<16x128xbf16>
    %c0_6 = arith.constant 0 : index
    %c7 = arith.constant 7 : index
    %c0_7 = arith.constant 0 : index
    %12 = vector.load %arg3[%c0_6, %c7, %c0_7] : memref<1x8x128xbf16, #tpu.memory_space<vmem>>, vector<1x1x128xbf16>
    %13 = vector.shape_cast %12 : vector<1x1x128xbf16> to vector<1x128xbf16>
    %14 = arith.extf %13 : vector<1x128xbf16> to vector<1x128xf32>
    %c0_8 = arith.constant 0 : index
    %c0_9 = arith.constant 0 : index
    %15 = vector.load %arg6[%c0_8, %c0_9] : memref<1x128xf32, #tpu.memory_space<vmem>>, vector<1x128xf32>
    %16 = arith.mulf %14, %15 : vector<1x128xf32>
    %c0_10 = arith.constant 0 : index
    %c0_11 = arith.constant 0 : index
    %17 = vector.load %arg7[%c0_10, %c0_11] : memref<1x128xf32, #tpu.memory_space<vmem>>, vector<1x128xf32>
    %18 = arith.addf %16, %17 : vector<1x128xf32>
    %cst_12 = arith.constant 0.000000e+00 : f32
    %19 = vector.broadcast %cst_12 : f32 to vector<1x128xf32>
    %20 = arith.maximumf %18, %19 : vector<1x128xf32>
    %21 = arith.truncf %20 : vector<1x128xf32> to vector<1x128xbf16>
    %c0_13 = arith.constant 0 : index
    %c0_14 = arith.constant 0 : index
    %c0_15 = arith.constant 0 : index
    %22 = vector.load %arg4[%c0_13, %c0_14, %c0_15] : memref<1x8x128xbf16, #tpu.memory_space<vmem>>, vector<1x1x128xbf16>
    %23 = vector.shape_cast %22 : vector<1x1x128xbf16> to vector<1x128xbf16>
    %24 = arith.extf %23 : vector<1x128xbf16> to vector<1x128xf32>
    %c0_16 = arith.constant 0 : index
    %c0_17 = arith.constant 0 : index
    %25 = vector.load %arg6[%c0_16, %c0_17] : memref<1x128xf32, #tpu.memory_space<vmem>>, vector<1x128xf32>
    %26 = arith.mulf %24, %25 : vector<1x128xf32>
    %c0_18 = arith.constant 0 : index
    %c0_19 = arith.constant 0 : index
    %27 = vector.load %arg7[%c0_18, %c0_19] : memref<1x128xf32, #tpu.memory_space<vmem>>, vector<1x128xf32>
    %28 = arith.addf %26, %27 : vector<1x128xf32>
    %cst_20 = arith.constant 0.000000e+00 : f32
    %29 = vector.broadcast %cst_20 : f32 to vector<1x128xf32>
    %30 = arith.maximumf %28, %29 : vector<1x128xf32>
    %31 = arith.truncf %30 : vector<1x128xf32> to vector<1x128xbf16>
    %c0_i32 = arith.constant 0 : i32
    %32 = arith.cmpi sgt, %arg1, %c0_i32 : i32
    %cst_21 = arith.constant 0.000000e+00 : bf16
    %33 = vector.broadcast %cst_21 : bf16 to vector<1x128xbf16>
    %34 = arith.select %32, %21, %33 : vector<1x128xbf16>
    %c0_i32_22 = arith.constant 0 : i32
    %35 = arith.cmpi slt, %arg1, %c0_i32_22 : i32
    %cst_23 = arith.constant 0.000000e+00 : bf16
    %36 = vector.broadcast %cst_23 : bf16 to vector<1x128xbf16>
    %37 = arith.select %35, %31, %36 : vector<1x128xbf16>
    %38 = tpu.concatenate %34, %11, %37 in 0 : vector<1x128xbf16>, vector<16x128xbf16>, vector<1x128xbf16> -> vector<18x128xbf16>
    %39 = vector.extract_strided_slice %38 {offsets = [0, 0], sizes = [16, 128], strides = [1, 1]} : vector<18x128xbf16> to vector<16x128xbf16>
    %c0_24 = arith.constant 0 : index
    %c0_25 = arith.constant 0 : index
    %c0_26 = arith.constant 0 : index
    %40 = vector.load %arg5[%c0_24, %c0_25, %c0_26] : memref<3x128x128xbf16, #tpu.memory_space<vmem>>, vector<1x128x128xbf16>
    %41 = vector.shape_cast %40 : vector<1x128x128xbf16> to vector<128x128xbf16>
    %cst_27 = arith.constant dense<0.000000e+00> : vector<16x128xf32>
    %42 = tpu.matmul %39, %41, %cst_27 {dimension_numbers = #tpu.dot_dimension_numbers<[1], [0], [0], [1], [0, 0, 1, 1], [], []>} : vector<16x128xbf16>, vector<128x128xbf16>, vector<16x128xf32> -> vector<16x128xf32>
    %43 = vector.extract_strided_slice %38 {offsets = [1, 0], sizes = [16, 128], strides = [1, 1]} : vector<18x128xbf16> to vector<16x128xbf16>
    %c1 = arith.constant 1 : index
    %c0_28 = arith.constant 0 : index
    %c0_29 = arith.constant 0 : index
    %44 = vector.load %arg5[%c1, %c0_28, %c0_29] : memref<3x128x128xbf16, #tpu.memory_space<vmem>>, vector<1x128x128xbf16>
    %45 = vector.shape_cast %44 : vector<1x128x128xbf16> to vector<128x128xbf16>
    %cst_30 = arith.constant dense<0.000000e+00> : vector<16x128xf32>
    %46 = tpu.matmul %43, %45, %cst_30 {dimension_numbers = #tpu.dot_dimension_numbers<[1], [0], [0], [1], [0, 0, 1, 1], [], []>} : vector<16x128xbf16>, vector<128x128xbf16>, vector<16x128xf32> -> vector<16x128xf32>
    %47 = arith.addf %42, %46 : vector<16x128xf32>
    %48 = vector.extract_strided_slice %38 {offsets = [2, 0], sizes = [16, 128], strides = [1, 1]} : vector<18x128xbf16> to vector<16x128xbf16>
    %c2 = arith.constant 2 : index
    %c0_31 = arith.constant 0 : index
    %c0_32 = arith.constant 0 : index
    %49 = vector.load %arg5[%c2, %c0_31, %c0_32] : memref<3x128x128xbf16, #tpu.memory_space<vmem>>, vector<1x128x128xbf16>
    %50 = vector.shape_cast %49 : vector<1x128x128xbf16> to vector<128x128xbf16>
    %cst_33 = arith.constant dense<0.000000e+00> : vector<16x128xf32>
    %51 = tpu.matmul %48, %50, %cst_33 {dimension_numbers = #tpu.dot_dimension_numbers<[1], [0], [0], [1], [0, 0, 1, 1], [], []>} : vector<16x128xbf16>, vector<128x128xbf16>, vector<16x128xf32> -> vector<16x128xf32>
    %52 = arith.addf %47, %51 : vector<16x128xf32>
    %cst_34 = arith.constant dense<0.000000e+00> : vector<128xf32>
    %53 = vector.multi_reduction <add>, %52, %cst_34 [0] : vector<16x128xf32> to vector<128xf32>
    %54 = vector.shape_cast %53 : vector<128xf32> to vector<1x128xf32>
    %c0_35 = arith.constant 0 : index
    %c0_36 = arith.constant 0 : index
    %c0_37 = arith.constant 0 : index
    %55 = vector.load %arg9[%c0_35, %c0_36, %c0_37] : memref<1x1x128xf32, #tpu.memory_space<vmem>>, vector<1x1x128xf32>
    %56 = vector.shape_cast %55 : vector<1x1x128xf32> to vector<1x128xf32>
    %57 = vector.shape_cast %54 : vector<1x128xf32> to vector<1x1x128xf32>
    tpu.vector_store %arg9[%c0_35, %c0_36, %c0_37], %57 {strides = array<i32>} : memref<1x1x128xf32, #tpu.memory_space<vmem>>, vector<1x1x128xf32>,
    %58 = arith.mulf %52, %52 : vector<16x128xf32>
    %cst_38 = arith.constant dense<0.000000e+00> : vector<128xf32>
    %59 = vector.multi_reduction <add>, %58, %cst_38 [0] : vector<16x128xf32> to vector<128xf32>
    %60 = vector.shape_cast %59 : vector<128xf32> to vector<1x128xf32>
    %c0_39 = arith.constant 0 : index
    %c0_40 = arith.constant 0 : index
    %c0_41 = arith.constant 0 : index
    %61 = vector.load %arg10[%c0_39, %c0_40, %c0_41] : memref<1x1x128xf32, #tpu.memory_space<vmem>>, vector<1x1x128xf32>
    %62 = vector.shape_cast %61 : vector<1x1x128xf32> to vector<1x128xf32>
    %63 = vector.shape_cast %60 : vector<1x128xf32> to vector<1x1x128xf32>
    tpu.vector_store %arg10[%c0_39, %c0_40, %c0_41], %63 {strides = array<i32>} : memref<1x1x128xf32, #tpu.memory_space<vmem>>, vector<1x1x128xf32>,
    %64 = arith.truncf %52 : vector<16x128xf32> to vector<16x128xbf16>
    %c0_42 = arith.constant 0 : index
    %c0_43 = arith.constant 0 : index
    %c0_44 = arith.constant 0 : index
    %65 = vector.load %arg8[%c0_42, %c0_43, %c0_44] : memref<1x16x128xbf16, #tpu.memory_space<vmem>>, vector<1x16x128xbf16>
    %66 = vector.shape_cast %65 : vector<1x16x128xbf16> to vector<16x128xbf16>
    %67 = vector.shape_cast %64 : vector<16x128xbf16> to vector<1x16x128xbf16>
    tpu.vector_store %arg8[%c0_42, %c0_43, %c0_44], %67 {strides = array<i32>} : memref<1x16x128xbf16, #tpu.memory_space<vmem>>, vector<1x16x128xbf16>,
    return
  }
  func.func @transform_0(%arg0: i32, %arg1: i32) -> (i32, i32, i32) {
    %c0_i32 = arith.constant 0 : i32
    %c0_i32_0 = arith.constant 0 : i32
    return %arg0, %arg1, %c0_i32 : i32, i32, i32
  }
  func.func @transform_1(%arg0: i32, %arg1: i32) -> (i32, i32, i32) {
    %c0_i32 = arith.constant 0 : i32
    %c0_i32_0 = arith.constant 0 : i32
    %c0_i32_1 = arith.constant 0 : i32
    return %arg0, %c0_i32, %c0_i32_0 : i32, i32, i32
  }
  func.func @transform_2(%arg0: i32, %arg1: i32) -> (i32, i32, i32) {
    %c0_i32 = arith.constant 0 : i32
    %c0_i32_0 = arith.constant 0 : i32
    %c0_i32_1 = arith.constant 0 : i32
    return %arg0, %c0_i32, %c0_i32_0 : i32, i32, i32
  }
  func.func @transform_3(%arg0: i32, %arg1: i32) -> (i32, i32, i32) {
    %c0_i32 = arith.constant 0 : i32
    %c0_i32_0 = arith.constant 0 : i32
    %c0_i32_1 = arith.constant 0 : i32
    %c0_i32_2 = arith.constant 0 : i32
    return %c0_i32, %c0_i32_0, %c0_i32_1 : i32, i32, i32
  }
  func.func @transform_4(%arg0: i32, %arg1: i32) -> (i32, i32) {
    %c0_i32 = arith.constant 0 : i32
    %c0_i32_0 = arith.constant 0 : i32
    %c0_i32_1 = arith.constant 0 : i32
    return %c0_i32, %c0_i32_0 : i32, i32
  }
  func.func @transform_5(%arg0: i32, %arg1: i32) -> (i32, i32) {
    %c0_i32 = arith.constant 0 : i32
    %c0_i32_0 = arith.constant 0 : i32
    %c0_i32_1 = arith.constant 0 : i32
    return %c0_i32, %c0_i32_0 : i32, i32
  }
  func.func @transform_6(%arg0: i32, %arg1: i32) -> (i32, i32, i32) {
    %c0_i32 = arith.constant 0 : i32
    %c0_i32_0 = arith.constant 0 : i32
    return %arg0, %arg1, %c0_i32 : i32, i32, i32
  }
  func.func @transform_7(%arg0: i32, %arg1: i32) -> (i32, i32, i32) {
    %c1_i32 = arith.constant 1 : i32
    %0 = arith.muli %arg0, %c1_i32 : i32
    %1 = arith.addi %0, %arg1 : i32
    %c0_i32 = arith.constant 0 : i32
    %c0_i32_0 = arith.constant 0 : i32
    %c0_i32_1 = arith.constant 0 : i32
    return %1, %c0_i32, %c0_i32_0 : i32, i32, i32
  }
  func.func @transform_8(%arg0: i32, %arg1: i32) -> (i32, i32, i32) {
    %c1_i32 = arith.constant 1 : i32
    %0 = arith.muli %arg0, %c1_i32 : i32
    %1 = arith.addi %0, %arg1 : i32
    %c0_i32 = arith.constant 0 : i32
    %c0_i32_0 = arith.constant 0 : i32
    %c0_i32_1 = arith.constant 0 : i32
    return %1, %c0_i32, %c0_i32_0 : i32, i32, i32
  }
}

module attributes {stable_mosaic.version = 11 : i64} {
  func.func @_bn_relu_kernel(%arg0: i32, %arg1: memref<32x128xbf16, #tpu.memory_space<vmem>>, %arg2: memref<1x128xf32, #tpu.memory_space<vmem>>, %arg3: memref<1x128xf32, #tpu.memory_space<vmem>>, %arg4: memref<32x128xf32, #tpu.memory_space<vmem>>) attributes {dimension_semantics = [#tpu.dimension_semantics<parallel>], iteration_bounds = array<i64: 1>, scalar_prefetch = 0 : i64, scratch_operands = 0 : i64, tpu.core_type = #tpu.core_type<tc>, window_params = [{transform_indices = @transform_0, window_bounds = array<i64: 32, 128>}, {pipeline_mode = #tpu.pipeline_mode<synchronous>, transform_indices = @transform_1, window_bounds = array<i64: 1, 128>}, {pipeline_mode = #tpu.pipeline_mode<synchronous>, transform_indices = @transform_2, window_bounds = array<i64: 1, 128>}, {transform_indices = @transform_3, window_bounds = array<i64: 32, 128>}]} {
    %c0 = arith.constant 0 : index
    %c0_0 = arith.constant 0 : index
    %0 = vector.load %arg1[%c0, %c0_0] : memref<32x128xbf16, #tpu.memory_space<vmem>>, vector<32x128xbf16>
    %1 = arith.extf %0 : vector<32x128xbf16> to vector<32x128xf32>
    %c0_1 = arith.constant 0 : index
    %c0_2 = arith.constant 0 : index
    %2 = vector.load %arg2[%c0_1, %c0_2] : memref<1x128xf32, #tpu.memory_space<vmem>>, vector<1x128xf32>
    %3 = vector.broadcast %2 : vector<1x128xf32> to vector<32x128xf32>
    %4 = arith.mulf %1, %3 : vector<32x128xf32>
    %c0_3 = arith.constant 0 : index
    %c0_4 = arith.constant 0 : index
    %5 = vector.load %arg3[%c0_3, %c0_4] : memref<1x128xf32, #tpu.memory_space<vmem>>, vector<1x128xf32>
    %6 = vector.broadcast %5 : vector<1x128xf32> to vector<32x128xf32>
    %7 = arith.addf %4, %6 : vector<32x128xf32>
    %cst = arith.constant 0.000000e+00 : f32
    %8 = vector.broadcast %cst : f32 to vector<32x128xf32>
    %9 = arith.maximumf %7, %8 : vector<32x128xf32>
    %c0_5 = arith.constant 0 : index
    %c0_6 = arith.constant 0 : index
    %10 = vector.load %arg4[%c0_5, %c0_6] : memref<32x128xf32, #tpu.memory_space<vmem>>, vector<32x128xf32>
    tpu.vector_store %arg4[%c0_5, %c0_6], %9 {strides = array<i32>} : memref<32x128xf32, #tpu.memory_space<vmem>>, vector<32x128xf32>,
    return
  }
  func.func @transform_0(%arg0: i32) -> (i32, i32) {
    %c0_i32 = arith.constant 0 : i32
    %c0_i32_0 = arith.constant 0 : i32
    return %arg0, %c0_i32 : i32, i32
  }
  func.func @transform_1(%arg0: i32) -> (i32, i32) {
    %c0_i32 = arith.constant 0 : i32
    %c0_i32_0 = arith.constant 0 : i32
    %c0_i32_1 = arith.constant 0 : i32
    return %c0_i32, %c0_i32_0 : i32, i32
  }
  func.func @transform_2(%arg0: i32) -> (i32, i32) {
    %c0_i32 = arith.constant 0 : i32
    %c0_i32_0 = arith.constant 0 : i32
    %c0_i32_1 = arith.constant 0 : i32
    return %c0_i32, %c0_i32_0 : i32, i32
  }
  func.func @transform_3(%arg0: i32) -> (i32, i32) {
    %c0_i32 = arith.constant 0 : i32
    %c0_i32_0 = arith.constant 0 : i32
    return %arg0, %c0_i32 : i32, i32
  }
}

</mosaic_0001>

<llo_original>
// kernel: double_conv.3
$region0: #{double_conv.3}
  #allocation0 [shape = 'u32[]', space=smem, size = 0x4, offset = 0x4, fixed_abs, tag = 'smem constant byte address 0x4 - core index']
  #allocation1 [shape = 'u32[72,128]{1,0:T(1,128)}', space=vmem, size = 0x9000, scoped, tag = 'internal scratch']
  %s0 = inlined_call_operand.vmem [shape: f32[2,16,64], index: 0, kind: input, shape index: {}, may-alias: {0,1,2}]
  %s1 = inlined_call_operand.vmem [shape: f32[2,16,64], index: 1, kind: input, shape index: {}, may-alias: {0,1,2}]
  %s2 = inlined_call_operand.vmem [shape: f32[2,16,64], index: 2, kind: input, shape index: {}, may-alias: {0,1,2}]
  %s3 = inlined_call_operand.vmem [shape: bf16[3,64,128], index: 3, kind: input, shape index: {}]
  %s4 = inlined_call_operand.vmem [shape: f32[1,64], index: 4, kind: input, shape index: {}, may-alias: {4,5}]
  %s5 = inlined_call_operand.vmem [shape: f32[1,64], index: 5, kind: input, shape index: {}, may-alias: {4,5}]
  %s6 = inlined_call_operand.vmem [shape: bf16[2,16,128], index: 6, kind: output, shape index: {0}]
  %s7 = inlined_call_operand.vmem [shape: f32[2,1,128], index: 7, kind: output, shape index: {1}]
  %s8 = inlined_call_operand.vmem [shape: f32[2,1,128], index: 8, kind: output, shape index: {2}]
  %9 = xla_tuple %s6, %s7, %s8
  %s10 = sld [smem:[#allocation0]]
  $region73: #{double_conv.3} parent=0
    _
  %s12 = ssub.s32 1, %s10
  %s13 = scalar_select 0, %s12, %s10
  loop: start=0, step=1, limit=4
  $region2: #{double_conv.3} parent=0 // loop_pre_header
    _
  $region3: #{double_conv.3} parent=0 // loop_header
    %s15 = sphi 0, %s19
    %p16 = scmp.ge.s32.totalorder %s15, 4
    %s22 = sphi 0, %s34
    %s23 = sphi 0, %s30
    %s24 = sphi 0, %s22
    %s25 = sphi 0, %s23
    %s26 = sphi 0, %s24
    %s27 = sphi 0, %s25
    %s39 = sphi 0, %s41
    %s42 = sphi 0, %s39
    %s43 = sphi 0, %s42
    %s59 = sphi 0, %s43
    %s65 = sphi 0, %s67
    %s68 = sphi 0, %s65
    %s69 = sphi 0, %s68
    %s85 = sphi 0, %s69
    %s91 = sphi 0, %s93
    %s94 = sphi 0, %s91
    %s95 = sphi 0, %s94
    %s111 = sphi 0, %s95
    %s115 = sphi 0, %s115
    %s117 = sphi 0, %s115
    %s118 = sphi 0, %s117
    %s132 = sphi 0, %s118
    %s136 = sphi 0, %s136
    %s138 = sphi 0, %s136
    %s139 = sphi 0, %s138
    %s153 = sphi 0, %s139
    %s157 = sphi 0, %s157
    %s159 = sphi 0, %s157
    %s160 = sphi 0, %s159
    %s174 = sphi 0, %s160
    %s182 = sphi 0, %s184
    %s185 = sphi 0, %s182
    %s186 = sphi 0, %s185
    %s202 = sphi 0, %s186
    %s210 = sphi 0, %s212
    %s213 = sphi 0, %s210
    %s214 = sphi 0, %s213
    %s230 = sphi 0, %s214
    %s238 = sphi 0, %s240
    %s241 = sphi 0, %s238
    %s242 = sphi 0, %s241
    %s258 = sphi 0, %s242
  $region4: #{double_conv.3} parent=0 // loop_header_branch
    %18 = sbr.rel (%p16) target = $region8
  $region5: #{double_conv.3} parent=0 // loop_body
    %s20 = ssub.s32 %s15, 1
    %s21 = ssub.s32 %s15, 2
    %s28 = sadd.s32 1, %s23
    %p29 = scmp.ge.s32.totalorder %s28, 1
    %s30 = scalar_select %p29, 0, %s28
    %s31 = sadd.s32 1, %s22
    %s32 = scalar_select %p29, %s31, %s22
    %p33 = scmp.ge.s32.totalorder %s32, 2
    %s34 = scalar_select %p33, 0, %s32
    %s35 = ssub.s32 %s22, %s34
    %s36 = ssub.s32 %s23, %s30
    %s37 = sor.u32 %s35, %s36
    %p38 = scmp.eq.s32.totalorder %s37, 0
    %s40 = sadd.s32 %s39, 1
    %s41 = scalar_select %p38, %s39, %s40
    %p44 = pneg %p38
    %p45 = scmp.eq.s32.totalorder %s15, 1
    %p46 = por %p44, %p45
    %p47 = scmp.ne.s32.totalorder %s39, %s42
    %p48 = scmp.eq.s32.totalorder %s15, 0
    %p49 = por %p47, %p48
    %p50 = scmp.ne.s32.totalorder %s39, %s42
    %p51 = scmp.eq.s32.totalorder %s20, 1
    %p52 = por %p50, %p51
    %p53 = scmp.ne.s32.totalorder %s42, %s43
    %p54 = scmp.eq.s32.totalorder %s20, 0
    %p55 = por %p53, %p54
    %p56 = scmp.ne.s32.totalorder %s42, %s43
    %p57 = scmp.eq.s32.totalorder %s21, 1
    %p58 = por %p56, %p57
    %p60 = scmp.ne.s32.totalorder %s43, %s59
    %p61 = scmp.eq.s32.totalorder %s21, 0
    %p62 = por %p60, %p61
    %s63 = ssub.s32 %s22, %s34
    %p64 = scmp.eq.s32.totalorder %s63, 0
    %s66 = sadd.s32 %s65, 1
    %s67 = scalar_select %p64, %s65, %s66
    %p70 = pneg %p64
    %p71 = scmp.eq.s32.totalorder %s15, 1
    %p72 = por %p70, %p71
    %p73 = scmp.ne.s32.totalorder %s65, %s68
    %p74 = scmp.eq.s32.totalorder %s15, 0
    %p75 = por %p73, %p74
    %p76 = scmp.ne.s32.totalorder %s65, %s68
    %p77 = scmp.eq.s32.totalorder %s20, 1
    %p78 = por %p76, %p77
    %p79 = scmp.ne.s32.totalorder %s68, %s69
    %p80 = scmp.eq.s32.totalorder %s20, 0
    %p81 = por %p79, %p80
    %p82 = scmp.ne.s32.totalorder %s68, %s69
    %p83 = scmp.eq.s32.totalorder %s21, 1
    %p84 = por %p82, %p83
    %p86 = scmp.ne.s32.totalorder %s69, %s85
    %p87 = scmp.eq.s32.totalorder %s21, 0
    %p88 = por %p86, %p87
    %s89 = ssub.s32 %s22, %s34
    %p90 = scmp.eq.s32.totalorder %s89, 0
    %s92 = sadd.s32 %s91, 1
    %s93 = scalar_select %p90, %s91, %s92
    %p96 = pneg %p90
    %p97 = scmp.eq.s32.totalorder %s15, 1
    %p98 = por %p96, %p97
    %p99 = scmp.ne.s32.totalorder %s91, %s94
    %p100 = scmp.eq.s32.totalorder %s15, 0
    %p101 = por %p99, %p100
    %p102 = scmp.ne.s32.totalorder %s91, %s94
    %p103 = scmp.eq.s32.totalorder %s20, 1
    %p104 = por %p102, %p103
    %p105 = scmp.ne.s32.totalorder %s94, %s95
    %p106 = scmp.eq.s32.totalorder %s20, 0
    %p107 = por %p105, %p106
    %p108 = scmp.ne.s32.totalorder %s94, %s95
    %p109 = scmp.eq.s32.totalorder %s21, 1
    %p110 = por %p108, %p109
    %p112 = scmp.ne.s32.totalorder %s95, %s111
    %p113 = scmp.eq.s32.totalorder %s21, 0
    %p114 = por %p112, %p113
    %s116 = sadd.s32 %s115, 1
    %p119 = scmp.eq.s32.totalorder %s15, 1
    %p120 = scmp.ne.s32.totalorder %s115, %s117
    %p121 = scmp.eq.s32.totalorder %s15, 0
    %p122 = por %p120, %p121
    %p123 = scmp.ne.s32.totalorder %s115, %s117
    %p124 = scmp.eq.s32.totalorder %s20, 1
    %p125 = por %p123, %p124
    %p126 = scmp.ne.s32.totalorder %s117, %s118
    %p127 = scmp.eq.s32.totalorder %s20, 0
    %p128 = por %p126, %p127
    %p129 = scmp.ne.s32.totalorder %s117, %s118
    %p130 = scmp.eq.s32.totalorder %s21, 1
    %p131 = por %p129, %p130
    %p133 = scmp.ne.s32.totalorder %s118, %s132
    %p134 = scmp.eq.s32.totalorder %s21, 0
    %p135 = por %p133, %p134
    %s137 = sadd.s32 %s136, 1
    %p140 = scmp.eq.s32.totalorder %s15, 1
    %p141 = scmp.ne.s32.totalorder %s136, %s138
    %p142 = scmp.eq.s32.totalorder %s15, 0
    %p143 = por %p141, %p142
    %p144 = scmp.ne.s32.totalorder %s136, %s138
    %p145 = scmp.eq.s32.totalorder %s20, 1
    %p146 = por %p144, %p145
    %p147 = scmp.ne.s32.totalorder %s138, %s139
    %p148 = scmp.eq.s32.totalorder %s20, 0
    %p149 = por %p147, %p148
    %p150 = scmp.ne.s32.totalorder %s138, %s139
    %p151 = scmp.eq.s32.totalorder %s21, 1
    %p152 = por %p150, %p151
    %p154 = scmp.ne.s32.totalorder %s139, %s153
    %p155 = scmp.eq.s32.totalorder %s21, 0
    %p156 = por %p154, %p155
    %s158 = sadd.s32 %s157, 1
    %p161 = scmp.eq.s32.totalorder %s15, 1
    %p162 = scmp.ne.s32.totalorder %s157, %s159
    %p163 = scmp.eq.s32.totalorder %s15, 0
    %p164 = por %p162, %p163
    %p165 = scmp.ne.s32.totalorder %s157, %s159
    %p166 = scmp.eq.s32.totalorder %s20, 1
    %p167 = por %p165, %p166
    %p168 = scmp.ne.s32.totalorder %s159, %s160
    %p169 = scmp.eq.s32.totalorder %s20, 0
    %p170 = por %p168, %p169
    %p171 = scmp.ne.s32.totalorder %s159, %s160
    %p172 = scmp.eq.s32.totalorder %s21, 1
    %p173 = por %p171, %p172
    %p175 = scmp.ne.s32.totalorder %s160, %s174
    %p176 = scmp.eq.s32.totalorder %s21, 0
    %p177 = por %p175, %p176
    %s178 = ssub.s32 %s22, %s34
    %s179 = ssub.s32 %s23, %s30
    %s180 = sor.u32 %s178, %s179
    %p181 = scmp.eq.s32.totalorder %s180, 0
    %s183 = sadd.s32 %s182, 1
    %s184 = scalar_select %p181, %s182, %s183
    %p187 = pneg %p181
    %p188 = scmp.eq.s32.totalorder %s15, 1
    %p189 = por %p187, %p188
    %p190 = scmp.ne.s32.totalorder %s182, %s185
    %p191 = scmp.eq.s32.totalorder %s15, 0
    %p192 = por %p190, %p191
    %p193 = scmp.ne.s32.totalorder %s182, %s185
    %p194 = scmp.eq.s32.totalorder %s20, 1
    %p195 = por %p193, %p194
    %p196 = scmp.ne.s32.totalorder %s185, %s186
    %p197 = scmp.eq.s32.totalorder %s20, 0
    %p198 = por %p196, %p197
    %p199 = scmp.ne.s32.totalorder %s185, %s186
    %p200 = scmp.eq.s32.totalorder %s21, 1
    %p201 = por %p199, %p200
    %p203 = scmp.ne.s32.totalorder %s186, %s202
    %p204 = scmp.eq.s32.totalorder %s21, 0
    %p205 = por %p203, %p204
    %s206 = sadd.s32 %s22, %s23
    %s207 = sadd.s32 %s34, %s30
    %s208 = ssub.s32 %s206, %s207
    %p209 = scmp.eq.s32.totalorder %s208, 0
    %s211 = sadd.s32 %s210, 1
    %s212 = scalar_select %p209, %s210, %s211
    %p215 = pneg %p209
    %p216 = scmp.eq.s32.totalorder %s15, 1
    %p217 = por %p215, %p216
    %p218 = scmp.ne.s32.totalorder %s210, %s213
    %p219 = scmp.eq.s32.totalorder %s15, 0
    %p220 = por %p218, %p219
    %p221 = scmp.ne.s32.totalorder %s210, %s213
    %p222 = scmp.eq.s32.totalorder %s20, 1
    %p223 = por %p221, %p222
    %p224 = scmp.ne.s32.totalorder %s213, %s214
    %p225 = scmp.eq.s32.totalorder %s20, 0
    %p226 = por %p224, %p225
    %p227 = scmp.ne.s32.totalorder %s213, %s214
    %p228 = scmp.eq.s32.totalorder %s21, 1
    %p229 = por %p227, %p228
    %p231 = scmp.ne.s32.totalorder %s214, %s230
    %p232 = scmp.eq.s32.totalorder %s21, 0
    %p233 = por %p231, %p232
    %s234 = sadd.s32 %s22, %s23
    %s235 = sadd.s32 %s34, %s30
    %s236 = ssub.s32 %s234, %s235
    %p237 = scmp.eq.s32.totalorder %s236, 0
    %s239 = sadd.s32 %s238, 1
    %s240 = scalar_select %p237, %s238, %s239
    %p243 = pneg %p237
    %p244 = scmp.eq.s32.totalorder %s15, 1
    %p245 = por %p243, %p244
    %p246 = scmp.ne.s32.totalorder %s238, %s241
    %p247 = scmp.eq.s32.totalorder %s15, 0
    %p248 = por %p246, %p247
    %p249 = scmp.ne.s32.totalorder %s238, %s241
    %p250 = scmp.eq.s32.totalorder %s20, 1
    %p251 = por %p249, %p250
    %p252 = scmp.ne.s32.totalorder %s241, %s242
    %p253 = scmp.eq.s32.totalorder %s20, 0
    %p254 = por %p252, %p253
    %p255 = scmp.ne.s32.totalorder %s241, %s242
    %p256 = scmp.eq.s32.totalorder %s21, 1
    %p257 = por %p255, %p256
    %p259 = scmp.ne.s32.totalorder %s242, %s258
    %p260 = scmp.eq.s32.totalorder %s21, 0
    %p261 = por %p259, %p260
    %p262 = scmp.le.s32.totalorder 1, %s15
    %p263 = scmp.lt.s32.totalorder %s15, 3
    %p264 = pnand %p262, %p263
    %p265 = pneg %p264
    // Predicated region
    $region9: #{double_conv.3} parent=5 // pred_check
      _
    $region10: #{double_conv.3} parent=5 // pred_check_branch
      %267 = sbr.rel (%p264) target = $region12
    $region11: #{double_conv.3} parent=5 // pred_region
      %s268 = ssub.s32 %s15, 1
      // Predicated region
      $region13: #{double_conv.3} parent=11 // pred_check
        %p269 = pneg %p128
      $region14: #{double_conv.3} parent=11 // pred_check_branch
        %271 = sbr.rel (%p269) target = $region16
      $region15: #{double_conv.3} parent=11 // pred_region
        _
      $region16: #{double_conv.3} parent=11 // pred_fallthru
        _
      // Predicated region
      $region17: #{double_conv.3} parent=11 // pred_check
        %p272 = pneg %p149
      $region18: #{double_conv.3} parent=11 // pred_check_branch
        %274 = sbr.rel (%p272) target = $region20
      $region19: #{double_conv.3} parent=11 // pred_region
        _
      $region20: #{double_conv.3} parent=11 // pred_fallthru
        _
      // Predicated region
      $region21: #{double_conv.3} parent=11 // pred_check
        %p275 = pneg %p170
      $region22: #{double_conv.3} parent=11 // pred_check_branch
        %277 = sbr.rel (%p275) target = $region24
      $region23: #{double_conv.3} parent=11 // pred_region
        _
      $region24: #{double_conv.3} parent=11 // pred_fallthru
        _
    $region12: #{double_conv.3} parent=5 // pred_fallthru
      _
    %p278 = scmp.lt.s32.totalorder %s15, 2
    // Predicated region
    $region25: #{double_conv.3} parent=5 // pred_check
      %p279 = pneg %p278
    $region26: #{double_conv.3} parent=5 // pred_check_branch
      %281 = sbr.rel (%p279) target = $region28
    $region27: #{double_conv.3} parent=5 // pred_region
      // Predicated region
      $region29: #{double_conv.3} parent=27 // pred_check
        %p282 = pneg %p49
      $region30: #{double_conv.3} parent=27 // pred_check_branch
        %284 = sbr.rel (%p282) target = $region32
      $region31: #{double_conv.3} parent=27 // pred_region
        %s285 = smul.u32 2, %s23
        %p286 = scmp.lt.s32.totalorder %s22, 1
        %s287 = scalar_select %p286, %s22, 1
        %p288 = scmp.lt.s32.totalorder %s285, 1
        %s289 = scalar_select %p288, %s285, 1
        %s290 = smul.addr %s287, 2
        %s291 = sadd.s32 %s289, %s290
        %s292 = smul.addr %s291, 8
        %s293 = scalar_lea.vmem %s0, %s292
        %s294 = smul.u32 2, %s23
      $region32: #{double_conv.3} parent=27 // pred_fallthru
        _
      // Predicated region
      $region33: #{double_conv.3} parent=27 // pred_check
        %p295 = pneg %p75
      $region34: #{double_conv.3} parent=27 // pred_check_branch
        %297 = sbr.rel (%p295) target = $region36
      $region35: #{double_conv.3} parent=27 // pred_region
        %p298 = scmp.lt.s32.totalorder %s22, 1
        %s299 = scalar_select %p298, %s22, 1
        %s300 = smul.addr %s299, 2
        %s301 = smul.addr %s300, 8
        %s302 = scalar_lea.vmem %s1, %s301
      $region36: #{double_conv.3} parent=27 // pred_fallthru
        _
      // Predicated region
      $region37: #{double_conv.3} parent=27 // pred_check
        %p303 = pneg %p101
      $region38: #{double_conv.3} parent=27 // pred_check_branch
        %305 = sbr.rel (%p303) target = $region40
      $region39: #{double_conv.3} parent=27 // pred_region
        %p306 = scmp.lt.s32.totalorder %s22, 1
        %s307 = scalar_select %p306, %s22, 1
        %s308 = smul.addr %s307, 2
        %s309 = smul.addr %s308, 8
        %s310 = scalar_lea.vmem %s2, %s309
      $region40: #{double_conv.3} parent=27 // pred_fallthru
        _
    $region28: #{double_conv.3} parent=5 // pred_fallthru
      _
    %p311 = scmp.le.s32.totalorder 1, %s15
    %p312 = scmp.lt.s32.totalorder %s15, 3
    %p313 = pnand %p311, %p312
    %p314 = pneg %p313
    // Predicated region
    $region41: #{double_conv.3} parent=5 // pred_check
      _
    $region42: #{double_conv.3} parent=5 // pred_check_branch
      %316 = sbr.rel (%p313) target = $region44
    $region43: #{double_conv.3} parent=5 // pred_region
      %s317 = ssub.s32 %s15, 1
      %s318 = smul.u32 2, %s25
      %p319 = scmp.lt.s32.totalorder %s24, 1
      %s320 = scalar_select %p319, %s24, 1
      %p321 = scmp.lt.s32.totalorder %s318, 1
      %s322 = scalar_select %p321, %s318, 1
      %s323 = smul.addr %s320, 2
      %s324 = sadd.s32 %s322, %s323
      %s325 = smul.addr %s324, 8
      %s326 = scalar_lea.vmem %s0, %s325
      %p327 = pneg %p55
      %p328 = pneg %p52
      %p329 = scmp.lt.s32.totalorder %s24, 1
      %s330 = scalar_select %p329, %s24, 1
      %s331 = smul.addr %s330, 2
      %s332 = smul.addr %s331, 8
      %s333 = scalar_lea.vmem %s1, %s332
      %p334 = pneg %p81
      %p335 = pneg %p78
      %p336 = scmp.lt.s32.totalorder %s24, 1
      %s337 = scalar_select %p336, %s24, 1
      %s338 = smul.addr %s337, 2
      %s339 = smul.addr %s338, 8
      %s340 = scalar_lea.vmem %s2, %s339
      %p341 = pneg %p107
      %p342 = pneg %p104
      %p343 = pneg %p128
      %p344 = pneg %p125
      %p345 = pneg %p149
      %p346 = pneg %p146
      %p347 = pneg %p170
      %p348 = pneg %p167
      %p349 = pneg %p198
      %p350 = pneg %p195
      %s351 = smul.u32 2, %s25
      %p352 = scmp.lt.s32.totalorder %s24, 1
      %s353 = scalar_select %p352, %s24, 1
      %p354 = scmp.lt.s32.totalorder %s351, 1
      %s355 = scalar_select %p354, %s351, 1
      %s356 = smul.addr %s353, 2
      %s357 = sadd.s32 %s355, %s356
      %s358 = smul.addr %s357, 4
      %s359 = scalar_lea.vmem %s6, %s358
      %p360 = pneg %p226
      %p361 = pneg %p223
      %s362 = sadd.s32 %s24, %s25
      %p363 = scmp.lt.s32.totalorder %s362, 1
      %s364 = scalar_select %p363, %s362, 1
      %s365 = scalar_lea.vmem %s7, %s364
      %p366 = pneg %p254
      %p367 = pneg %p251
      %s368 = sadd.s32 %s24, %s25
      %p369 = scmp.lt.s32.totalorder %s368, 1
      %s370 = scalar_select %p369, %s368, 1
      %s371 = scalar_lea.vmem %s8, %s370
      %s372 = smul.u32 2, %s25
      %p373 = scmp.lt.s32.totalorder %s24, 1
      %s374 = scalar_select %p373, %s24, 1
      %p375 = scmp.lt.s32.totalorder %s372, 1
      %s376 = scalar_select %p375, %s372, 1
      %s377 = smul.addr %s374, 2
      %s378 = sadd.s32 %s376, %s377
      %s379 = smul.addr %s378, 8
      %s380 = scalar_lea.vmem %s0, %s379
      %s381 = smul.u32 2, %s25
      %p382 = scmp.lt.s32.totalorder %s24, 1
      %s383 = scalar_select %p382, %s24, 1
      %s384 = smul.addr %s383, 2
      %s385 = smul.addr %s384, 8
      %s386 = scalar_lea.vmem %s1, %s385
      %p387 = scmp.lt.s32.totalorder %s24, 1
      %s388 = scalar_select %p387, %s24, 1
      %s389 = smul.addr %s388, 2
      %s390 = smul.addr %s389, 8
      %s391 = scalar_lea.vmem %s2, %s390
      %s392 = smul.u32 2, %s25
      %p393 = scmp.lt.s32.totalorder %s24, 1
      %s394 = scalar_select %p393, %s24, 1
      %p395 = scmp.lt.s32.totalorder %s392, 1
      %s396 = scalar_select %p395, %s392, 1
      %s397 = smul.addr %s394, 2
      %s398 = sadd.s32 %s396, %s397
      %s399 = smul.addr %s398, 4
      %s400 = scalar_lea.vmem %s6, %s399
      %s401 = smul.u32 2, %s25
      %s402 = sadd.s32 %s24, %s25
      %p403 = scmp.lt.s32.totalorder %s402, 1
      %s404 = scalar_select %p403, %s402, 1
      %s405 = scalar_lea.vmem %s7, %s404
      %s406 = sadd.s32 %s24, %s25
      %s407 = sadd.s32 %s24, %s25
      %p408 = scmp.lt.s32.totalorder %s407, 1
      %s409 = scalar_select %p408, %s407, 1
      %s410 = scalar_lea.vmem %s8, %s409
      %s411 = sadd.s32 %s24, %s25
      %v413 = vld [vmem:[%s380] sm:$0xff]
      %v414 = vld [vmem:[%s380 + $0x8] sm:$0xff]
      %v415 = vpack.c.bf16 %v413, %v413
      %v416 = vpack.c.bf16 %v414, %v414
      %v417 = vld [vmem:[%s386 + $0x7] sm:$0x1]
      %v418 = vpack.c.bf16 %v417, %v417
      %v419 = vld [vmem:[%s391] sm:$0x1]
      %v420 = vpack.c.bf16 %v419, %v419
      %p421 = scmp.gt.s32.totalorder %s25, 0
      %s422 = scalar_select %p421, 1, 0
      %v423 = vstv %s422
      %vm424 = vcmp.eq.s32.totalorder %v423, 1
      %v425 = vsel %vm424, %v418, 0
      %p426 = scmp.lt.s32.totalorder %s25, 0
      %s427 = scalar_select %p426, 1, 0
      %v428 = vstv %s427
      %vm429 = vcmp.eq.s32.totalorder %v428, 1
      %v430 = vsel %vm429, %v420, 0
      %v433 = vunpack.c.l.b16 %v415
      %v434 = vunpack.c.l.b16 %v416
      %v435 = vpack.c.b16 %v434, %v433
      %v437 = vshrl.u32 %v435, 16
      %v439 = vrot.slane %v437, 7
      %v440 = vshll.u32 %v435, 16
      %v442 = vor.u32 %v439, %v440
      %v446 = vunpack.c.l.b16 %v430
      %v447 = vpack.c.b16 %v446, %v446
      %v449 = vshll.u32 %v447, 16
      %vm452 = vcmask 1040384
      %vm453 = vsmask.f32 256
      %vm454 = vmand %vm452, %vm453
      %v455 = vsel %vm454, %v425, %v442
      %v456 = vsel %vm454, %v439, %v449
      %v457 = vld [vmem:[%s3] sm:$0xf]
      %v458 = vld [vmem:[%s3 + $0x4] sm:$0xf]
      %v459 = vld [vmem:[%s3 + $0x8] sm:$0xf]
      %v460 = vld [vmem:[%s3 + $0xc] sm:$0xf]
      %v461 = vld [vmem:[%s3 + $0x10] sm:$0xf]
      %v462 = vld [vmem:[%s3 + $0x14] sm:$0xf]
      %v463 = vld [vmem:[%s3 + $0x18] sm:$0xf]
      %v464 = vld [vmem:[%s3 + $0x1c] sm:$0xf]
      %s465 = scalar_lea.vmem %s3, 32
      %v466 = vld [vmem:[%s465] sm:$0xf]
      %v467 = vld [vmem:[%s465 + $0x4] sm:$0xf]
      %v468 = vld [vmem:[%s465 + $0x8] sm:$0xf]
      %v469 = vld [vmem:[%s465 + $0xc] sm:$0xf]
      %v470 = vld [vmem:[%s465 + $0x10] sm:$0xf]
      %v471 = vld [vmem:[%s465 + $0x14] sm:$0xf]
      %v472 = vld [vmem:[%s465 + $0x18] sm:$0xf]
      %v473 = vld [vmem:[%s465 + $0x1c] sm:$0xf]
      %vm474 = vsmask.f32 7424
      %v476 = vshrl.u32 %v455, 16
      %v478 = vshll.u32 %v455, 16
      %v480 = vrot.slane %v478, 1
      %v481 = vor.u32 %v476, %v480
      %v483 = vshll.u32 %v456, 16
      %v485 = vrot.slane %v483, 1
      %v486 = vsel %vm474, %v481, %v485
      %v495 = vunpack.c.l.b16 %v466
      %v496 = vunpack.c.l.b16 %v467
      %v497 = vunpack.c.l.b16 %v468
      %v498 = vunpack.c.l.b16 %v469
      %v499 = vunpack.c.l.b16 %v470
      %v500 = vunpack.c.l.b16 %v471
      %v501 = vunpack.c.l.b16 %v472
      %v502 = vunpack.c.l.b16 %v473
      %v503 = vpack.c.b16 %v496, %v495
      %v504 = vpack.c.b16 %v498, %v497
      %v505 = vpack.c.b16 %v500, %v499
      %v506 = vpack.c.b16 %v502, %v501
      %vm511 = vcmask 523264
      %v513 = vsel %vm511, %v486, 0
      %515 = vmatpush.bf16.msra.mxu0 0
      %516 = vmatpush.bf16.msra.mxu0 0
      %517 = vmatpush.bf16.msra.mxu0 0
      %518 = vmatpush.bf16.msra.mxu0 0
      %519 = vmatpush.bf16.msra.mxu0 %v506
      %520 = vmatpush.bf16.msra.mxu0 %v505
      %521 = vmatpush.bf16.msra.mxu0 %v504
      %522 = vmatpush.bf16.msra.mxu0 %v503
      %523 = vmatmul.bf16.gmra.mxu0 %v513
      %v524 = vpop.f32.mrf.mxu0
      %v525 = vadd.f32 0.0, %v524
      %v526 = vpop.f32.mrf.mxu0
      %v527 = vadd.f32 0.0, %v526
      %528 = vdwg.mxu0
      %v537 = vunpack.c.l.b16 %v457
      %v538 = vunpack.c.l.b16 %v458
      %v539 = vunpack.c.l.b16 %v459
      %v540 = vunpack.c.l.b16 %v460
      %v541 = vunpack.c.l.b16 %v461
      %v542 = vunpack.c.l.b16 %v462
      %v543 = vunpack.c.l.b16 %v463
      %v544 = vunpack.c.l.b16 %v464
      %v545 = vpack.c.b16 %v538, %v537
      %v546 = vpack.c.b16 %v540, %v539
      %v547 = vpack.c.b16 %v542, %v541
      %v548 = vpack.c.b16 %v544, %v543
      %v553 = vsel %vm511, %v455, 0
      %555 = vmatpush.bf16.msra.mxu0 0
      %556 = vmatpush.bf16.msra.mxu0 0
      %557 = vmatpush.bf16.msra.mxu0 0
      %558 = vmatpush.bf16.msra.mxu0 0
      %559 = vmatpush.bf16.msra.mxu0 %v548
      %560 = vmatpush.bf16.msra.mxu0 %v547
      %561 = vmatpush.bf16.msra.mxu0 %v546
      %562 = vmatpush.bf16.msra.mxu0 %v545
      %563 = vmatmul.bf16.gmra.mxu0 %v553
      %v564 = vpop.f32.mrf.mxu0
      %v565 = vadd.f32 %v525, %v564
      %v566 = vpop.f32.mrf.mxu0
      %v567 = vadd.f32 %v527, %v566
      %568 = vdwg.mxu0
      %s569 = scalar_lea.vmem %s3, 64
      %v570 = vld [vmem:[%s569] sm:$0xf]
      %v571 = vld [vmem:[%s569 + $0x4] sm:$0xf]
      %v572 = vld [vmem:[%s569 + $0x8] sm:$0xf]
      %v573 = vld [vmem:[%s569 + $0xc] sm:$0xf]
      %v574 = vld [vmem:[%s569 + $0x10] sm:$0xf]
      %v575 = vld [vmem:[%s569 + $0x14] sm:$0xf]
      %v576 = vld [vmem:[%s569 + $0x18] sm:$0xf]
      %v577 = vld [vmem:[%s569 + $0x1c] sm:$0xf]
      %vm580 = vcmask 1046528
      %v581 = vrot.slane %v455, 1
      %v582 = vrot.slane %v456, 1
      %v583 = vsel %vm580, %v581, %v582
      %v592 = vunpack.c.l.b16 %v570
      %v593 = vunpack.c.l.b16 %v571
      %v594 = vunpack.c.l.b16 %v572
      %v595 = vunpack.c.l.b16 %v573
      %v596 = vunpack.c.l.b16 %v574
      %v597 = vunpack.c.l.b16 %v575
      %v598 = vunpack.c.l.b16 %v576
      %v599 = vunpack.c.l.b16 %v577
      %v600 = vpack.c.b16 %v593, %v592
      %v601 = vpack.c.b16 %v595, %v594
      %v602 = vpack.c.b16 %v597, %v596
      %v603 = vpack.c.b16 %v599, %v598
      %v609 = vsel %vm511, %v583, 0
      %611 = vmatpush.bf16.msra.mxu0 0
      %612 = vmatpush.bf16.msra.mxu0 0
      %613 = vmatpush.bf16.msra.mxu0 0
      %614 = vmatpush.bf16.msra.mxu0 0
      %615 = vmatpush.bf16.msra.mxu0 %v603
      %616 = vmatpush.bf16.msra.mxu0 %v602
      %617 = vmatpush.bf16.msra.mxu0 %v601
      %618 = vmatpush.bf16.msra.mxu0 %v600
      %619 = vmatmul.bf16.gmra.mxu0 %v609
      %v620 = vpop.f32.mrf.mxu0
      %v621 = vadd.f32 0.0, %v620
      %v622 = vpop.f32.mrf.mxu0
      %v623 = vadd.f32 0.0, %v622
      %624 = vdwg.mxu0
      %v625 = vadd.f32 %v565, %v621
      %v626 = vadd.f32 %v567, %v623
      %v627 = vadd.f32 %v625, %v626
      %v628 = vrot.slane %v627, 4
      %v629 = vadd.f32 %v627, %v628
      %v630 = vrot.slane %v629, 2
      %v631 = vadd.f32 %v629, %v630
      %v632 = vrot.slane %v631, 1
      %v633 = vadd.f32 %v631, %v632
      %634 = vst [vmem:[%s405] sm:$0x1] %v633
      %v635 = vmul.f32 %v625, %v625
      %v636 = vmul.f32 %v626, %v626
      %v637 = vadd.f32 %v635, %v636
      %v638 = vrot.slane %v637, 4
      %v639 = vadd.f32 %v637, %v638
      %v640 = vrot.slane %v639, 2
      %v641 = vadd.f32 %v639, %v640
      %v642 = vrot.slane %v641, 1
      %v643 = vadd.f32 %v641, %v642
      %644 = vst [vmem:[%s410] sm:$0x1] %v643
      %v645 = vpack.c.bf16 %v625, %v625
      %v646 = vpack.c.bf16 %v626, %v626
      %647 = vst [vmem:[%s400] sm:$0xf] %v645
      %648 = vst [vmem:[%s400 + $0x4] sm:$0xf] %v646
      %s649 = smul.u32 2, %s25
      %p650 = scmp.lt.s32.totalorder %s24, 1
      %s651 = scalar_select %p650, %s24, 1
      %p652 = scmp.lt.s32.totalorder %s649, 1
      %s653 = scalar_select %p652, %s649, 1
      %s654 = smul.addr %s651, 2
      %s655 = sadd.s32 %s653, %s654
      %s656 = smul.addr %s655, 4
      %s657 = scalar_lea.vmem %s6, %s656
      %s658 = sadd.s32 %s24, %s25
      %p659 = scmp.lt.s32.totalorder %s658, 1
      %s660 = scalar_select %p659, %s658, 1
      %s661 = scalar_lea.vmem %s7, %s660
      %s662 = sadd.s32 %s24, %s25
      %p663 = scmp.lt.s32.totalorder %s662, 1
      %s664 = scalar_select %p663, %s662, 1
      %s665 = scalar_lea.vmem %s8, %s664
      // Predicated region
      $region45: #{double_conv.3} parent=43 // pred_check
        %p666 = pneg %p195
      $region46: #{double_conv.3} parent=43 // pred_check_branch
        %668 = sbr.rel (%p666) target = $region48
      $region47: #{double_conv.3} parent=43 // pred_region
        %s669 = smul.u32 2, %s25
      $region48: #{double_conv.3} parent=43 // pred_fallthru
        _
      // Predicated region
      $region49: #{double_conv.3} parent=43 // pred_check
        %p670 = pneg %p223
      $region50: #{double_conv.3} parent=43 // pred_check_branch
        %672 = sbr.rel (%p670) target = $region52
      $region51: #{double_conv.3} parent=43 // pred_region
        %s673 = sadd.s32 %s24, %s25
      $region52: #{double_conv.3} parent=43 // pred_fallthru
        _
      // Predicated region
      $region53: #{double_conv.3} parent=43 // pred_check
        %p674 = pneg %p251
      $region54: #{double_conv.3} parent=43 // pred_check_branch
        %676 = sbr.rel (%p674) target = $region56
      $region55: #{double_conv.3} parent=43 // pred_region
        %s677 = sadd.s32 %s24, %s25
      $region56: #{double_conv.3} parent=43 // pred_fallthru
        _
    $region44: #{double_conv.3} parent=5 // pred_fallthru
      _
    %p678 = scmp.le.s32.totalorder 2, %s15
    // Predicated region
    $region57: #{double_conv.3} parent=5 // pred_check
      %p679 = pneg %p678
    $region58: #{double_conv.3} parent=5 // pred_check_branch
      %681 = sbr.rel (%p679) target = $region60
    $region59: #{double_conv.3} parent=5 // pred_region
      %s682 = ssub.s32 %s15, 2
      // Predicated region
      $region61: #{double_conv.3} parent=59 // pred_check
        %p683 = pneg %p201
      $region62: #{double_conv.3} parent=59 // pred_check_branch
        %685 = sbr.rel (%p683) target = $region64
      $region63: #{double_conv.3} parent=59 // pred_region
        %s686 = smul.u32 2, %s27
        %p687 = scmp.lt.s32.totalorder %s26, 1
        %s688 = scalar_select %p687, %s26, 1
        %p689 = scmp.lt.s32.totalorder %s686, 1
        %s690 = scalar_select %p689, %s686, 1
        %s691 = smul.addr %s688, 2
        %s692 = sadd.s32 %s690, %s691
        %s693 = smul.addr %s692, 4
        %s694 = scalar_lea.vmem %s6, %s693
      $region64: #{double_conv.3} parent=59 // pred_fallthru
        _
      // Predicated region
      $region65: #{double_conv.3} parent=59 // pred_check
        %p695 = pneg %p229
      $region66: #{double_conv.3} parent=59 // pred_check_branch
        %697 = sbr.rel (%p695) target = $region68
      $region67: #{double_conv.3} parent=59 // pred_region
        %s698 = sadd.s32 %s26, %s27
        %p699 = scmp.lt.s32.totalorder %s698, 1
        %s700 = scalar_select %p699, %s698, 1
        %s701 = scalar_lea.vmem %s7, %s700
      $region68: #{double_conv.3} parent=59 // pred_fallthru
        _
      // Predicated region
      $region69: #{double_conv.3} parent=59 // pred_check
        %p702 = pneg %p257
      $region70: #{double_conv.3} parent=59 // pred_check_branch
        %704 = sbr.rel (%p702) target = $region72
      $region71: #{double_conv.3} parent=59 // pred_region
        %s705 = sadd.s32 %s26, %s27
        %p706 = scmp.lt.s32.totalorder %s705, 1
        %s707 = scalar_select %p706, %s705, 1
        %s708 = scalar_lea.vmem %s8, %s707
      $region72: #{double_conv.3} parent=59 // pred_fallthru
        _
    $region60: #{double_conv.3} parent=5 // pred_fallthru
      _
  $region6: #{double_conv.3} parent=0 // loop_footer
    %s19 = sadd.s32 1, %s15
  $region7: #{double_conv.3} parent=0 // loop_footer_branch
    %14 = sbr.rel target = $region3
  $region8: #{double_conv.3} parent=0 // loop_exit
    _

// kernel: double_conv.5
$region0: #{double_conv.5}
  #allocation0 [shape = 'u32[]', space=smem, size = 0x4, offset = 0x4, fixed_abs, tag = 'smem constant byte address 0x4 - core index']
  #allocation1 [shape = 'u32[72,128]{1,0:T(1,128)}', space=vmem, size = 0x9000, scoped, tag = 'internal scratch']
  %s0 = inlined_call_operand.vmem [shape: bf16[32,128], index: 0, kind: input, shape index: {}]
  %s1 = inlined_call_operand.vmem [shape: f32[1,128], index: 1, kind: input, shape index: {}]
  %s2 = inlined_call_operand.vmem [shape: f32[1,128], index: 2, kind: input, shape index: {}]
  %s3 = inlined_call_operand.vmem [shape: f32[32,128], index: 3, kind: output, shape index: {}]
  %s4 = sld [smem:[#allocation0]]
  $region22: #{double_conv.5} parent=0
    _
  %s6 = ssub.s32 1, %s4
  %s7 = scalar_select 0, %s6, %s4
  // Predicated region
  $region2: #{double_conv.5} parent=0 // pred_check
    _
  $region3: #{double_conv.5} parent=0 // pred_check_branch
    %9 = sbr.rel (0) target = $region5
  $region4: #{double_conv.5} parent=0 // pred_region
    _
  $region5: #{double_conv.5} parent=0 // pred_fallthru
    _
  // Predicated region
  $region6: #{double_conv.5} parent=0 // pred_check
    _
  $region7: #{double_conv.5} parent=0 // pred_check_branch
    %11 = sbr.rel (0) target = $region9
  $region8: #{double_conv.5} parent=0 // pred_region
    _
  $region9: #{double_conv.5} parent=0 // pred_fallthru
    _
  // Predicated region
  $region10: #{double_conv.5} parent=0 // pred_check
    _
  $region11: #{double_conv.5} parent=0 // pred_check_branch
    %13 = sbr.rel (0) target = $region13
  $region12: #{double_conv.5} parent=0 // pred_region
    _
  $region13: #{double_conv.5} parent=0 // pred_fallthru
    _
  %v14 = vld [vmem:[%s0] sm:$0xf]
  %v15 = vld [vmem:[%s0 + $0x4] sm:$0xf]
  %v16 = vld [vmem:[%s0 + $0x8] sm:$0xf]
  %v17 = vld [vmem:[%s0 + $0xc] sm:$0xf]
  %v18 = vunpack.c.l.bf16 %v14
  %v19 = vunpack.c.l.bf16 %v15
  %v20 = vunpack.c.l.bf16 %v16
  %v21 = vunpack.c.l.bf16 %v17
  %v22 = vld [vmem:[%s1] sm:$0x1]
  %v24 = vperm.slane %v22, 0
  %v26 = vmul.f32 %v18, %v24
  %v27 = vmul.f32 %v19, %v24
  %v28 = vmul.f32 %v20, %v24
  %v29 = vmul.f32 %v21, %v24
  %v30 = vld [vmem:[%s2] sm:$0x1]
  %v32 = vperm.slane %v30, 0
  %v34 = vadd.f32 %v26, %v32
  %v35 = vadd.f32 %v27, %v32
  %v36 = vadd.f32 %v28, %v32
  %v37 = vadd.f32 %v29, %v32
  %v38 = vmax.f32 %v34, 0.0
  %v39 = vmax.f32 %v35, 0.0
  %v40 = vmax.f32 %v36, 0.0
  %v41 = vmax.f32 %v37, 0.0
  %42 = vst [vmem:[%s3] sm:$0xff] %v38
  %43 = vst [vmem:[%s3 + $0x8] sm:$0xff] %v39
  %44 = vst [vmem:[%s3 + $0x10] sm:$0xff] %v40
  %45 = vst [vmem:[%s3 + $0x18] sm:$0xff] %v41
  // Predicated region
  $region14: #{double_conv.5} parent=0 // pred_check
    _
  $region15: #{double_conv.5} parent=0 // pred_check_branch
    %47 = sbr.rel (0) target = $region17
  $region16: #{double_conv.5} parent=0 // pred_region
    _
  $region17: #{double_conv.5} parent=0 // pred_fallthru
    _
  // Predicated region
  $region18: #{double_conv.5} parent=0 // pred_check
    _
  $region19: #{double_conv.5} parent=0 // pred_check_branch
    %49 = sbr.rel (0) target = $region21
  $region20: #{double_conv.5} parent=0 // pred_region
    _
  $region21: #{double_conv.5} parent=0 // pred_fallthru
    _

// kernel: double_conv.4
$region0: #{double_conv.4}
  #allocation0 [shape = 'u32[]', space=smem, size = 0x4, offset = 0x4, fixed_abs, tag = 'smem constant byte address 0x4 - core index']
  #allocation1 [shape = 'u32[72,128]{1,0:T(1,128)}', space=vmem, size = 0x9000, scoped, tag = 'internal scratch']
  %s0 = inlined_call_operand.vmem [shape: bf16[2,16,128], index: 0, kind: input, shape index: {}, may-alias: {0,1,2}]
  %s1 = inlined_call_operand.vmem [shape: bf16[2,16,128], index: 1, kind: input, shape index: {}, may-alias: {0,1,2}]
  %s2 = inlined_call_operand.vmem [shape: bf16[2,16,128], index: 2, kind: input, shape index: {}, may-alias: {0,1,2}]
  %s3 = inlined_call_operand.vmem [shape: bf16[3,128,128], index: 3, kind: input, shape index: {}]
  %s4 = inlined_call_operand.vmem [shape: f32[1,128], index: 4, kind: input, shape index: {}]
  %s5 = inlined_call_operand.vmem [shape: f32[1,128], index: 5, kind: input, shape index: {}]
  %s6 = inlined_call_operand.vmem [shape: bf16[2,16,128], index: 6, kind: output, shape index: {0}]
  %s7 = inlined_call_operand.vmem [shape: f32[2,1,128], index: 7, kind: output, shape index: {1}]
  %s8 = inlined_call_operand.vmem [shape: f32[2,1,128], index: 8, kind: output, shape index: {2}]
  %9 = xla_tuple %s6, %s7, %s8
  %s10 = sld [smem:[#allocation0]]
  $region73: #{double_conv.4} parent=0
    _
  %s12 = ssub.s32 1, %s10
  %s13 = scalar_select 0, %s12, %s10
  loop: start=0, step=1, limit=4
  $region2: #{double_conv.4} parent=0 // loop_pre_header
    _
  $region3: #{double_conv.4} parent=0 // loop_header
    %s15 = sphi 0, %s19
    %p16 = scmp.ge.s32.totalorder %s15, 4
    %s22 = sphi 0, %s34
    %s23 = sphi 0, %s30
    %s24 = sphi 0, %s22
    %s25 = sphi 0, %s23
    %s26 = sphi 0, %s24
    %s27 = sphi 0, %s25
    %s39 = sphi 0, %s41
    %s42 = sphi 0, %s39
    %s43 = sphi 0, %s42
    %s59 = sphi 0, %s43
    %s65 = sphi 0, %s67
    %s68 = sphi 0, %s65
    %s69 = sphi 0, %s68
    %s85 = sphi 0, %s69
    %s91 = sphi 0, %s93
    %s94 = sphi 0, %s91
    %s95 = sphi 0, %s94
    %s111 = sphi 0, %s95
    %s115 = sphi 0, %s115
    %s117 = sphi 0, %s115
    %s118 = sphi 0, %s117
    %s132 = sphi 0, %s118
    %s136 = sphi 0, %s136
    %s138 = sphi 0, %s136
    %s139 = sphi 0, %s138
    %s153 = sphi 0, %s139
    %s157 = sphi 0, %s157
    %s159 = sphi 0, %s157
    %s160 = sphi 0, %s159
    %s174 = sphi 0, %s160
    %s182 = sphi 0, %s184
    %s185 = sphi 0, %s182
    %s186 = sphi 0, %s185
    %s202 = sphi 0, %s186
    %s210 = sphi 0, %s212
    %s213 = sphi 0, %s210
    %s214 = sphi 0, %s213
    %s230 = sphi 0, %s214
    %s238 = sphi 0, %s240
    %s241 = sphi 0, %s238
    %s242 = sphi 0, %s241
    %s258 = sphi 0, %s242
  $region4: #{double_conv.4} parent=0 // loop_header_branch
    %18 = sbr.rel (%p16) target = $region8
  $region5: #{double_conv.4} parent=0 // loop_body
    %s20 = ssub.s32 %s15, 1
    %s21 = ssub.s32 %s15, 2
    %s28 = sadd.s32 1, %s23
    %p29 = scmp.ge.s32.totalorder %s28, 1
    %s30 = scalar_select %p29, 0, %s28
    %s31 = sadd.s32 1, %s22
    %s32 = scalar_select %p29, %s31, %s22
    %p33 = scmp.ge.s32.totalorder %s32, 2
    %s34 = scalar_select %p33, 0, %s32
    %s35 = ssub.s32 %s22, %s34
    %s36 = ssub.s32 %s23, %s30
    %s37 = sor.u32 %s35, %s36
    %p38 = scmp.eq.s32.totalorder %s37, 0
    %s40 = sadd.s32 %s39, 1
    %s41 = scalar_select %p38, %s39, %s40
    %p44 = pneg %p38
    %p45 = scmp.eq.s32.totalorder %s15, 1
    %p46 = por %p44, %p45
    %p47 = scmp.ne.s32.totalorder %s39, %s42
    %p48 = scmp.eq.s32.totalorder %s15, 0
    %p49 = por %p47, %p48
    %p50 = scmp.ne.s32.totalorder %s39, %s42
    %p51 = scmp.eq.s32.totalorder %s20, 1
    %p52 = por %p50, %p51
    %p53 = scmp.ne.s32.totalorder %s42, %s43
    %p54 = scmp.eq.s32.totalorder %s20, 0
    %p55 = por %p53, %p54
    %p56 = scmp.ne.s32.totalorder %s42, %s43
    %p57 = scmp.eq.s32.totalorder %s21, 1
    %p58 = por %p56, %p57
    %p60 = scmp.ne.s32.totalorder %s43, %s59
    %p61 = scmp.eq.s32.totalorder %s21, 0
    %p62 = por %p60, %p61
    %s63 = ssub.s32 %s22, %s34
    %p64 = scmp.eq.s32.totalorder %s63, 0
    %s66 = sadd.s32 %s65, 1
    %s67 = scalar_select %p64, %s65, %s66
    %p70 = pneg %p64
    %p71 = scmp.eq.s32.totalorder %s15, 1
    %p72 = por %p70, %p71
    %p73 = scmp.ne.s32.totalorder %s65, %s68
    %p74 = scmp.eq.s32.totalorder %s15, 0
    %p75 = por %p73, %p74
    %p76 = scmp.ne.s32.totalorder %s65, %s68
    %p77 = scmp.eq.s32.totalorder %s20, 1
    %p78 = por %p76, %p77
    %p79 = scmp.ne.s32.totalorder %s68, %s69
    %p80 = scmp.eq.s32.totalorder %s20, 0
    %p81 = por %p79, %p80
    %p82 = scmp.ne.s32.totalorder %s68, %s69
    %p83 = scmp.eq.s32.totalorder %s21, 1
    %p84 = por %p82, %p83
    %p86 = scmp.ne.s32.totalorder %s69, %s85
    %p87 = scmp.eq.s32.totalorder %s21, 0
    %p88 = por %p86, %p87
    %s89 = ssub.s32 %s22, %s34
    %p90 = scmp.eq.s32.totalorder %s89, 0
    %s92 = sadd.s32 %s91, 1
    %s93 = scalar_select %p90, %s91, %s92
    %p96 = pneg %p90
    %p97 = scmp.eq.s32.totalorder %s15, 1
    %p98 = por %p96, %p97
    %p99 = scmp.ne.s32.totalorder %s91, %s94
    %p100 = scmp.eq.s32.totalorder %s15, 0
    %p101 = por %p99, %p100
    %p102 = scmp.ne.s32.totalorder %s91, %s94
    %p103 = scmp.eq.s32.totalorder %s20, 1
    %p104 = por %p102, %p103
    %p105 = scmp.ne.s32.totalorder %s94, %s95
    %p106 = scmp.eq.s32.totalorder %s20, 0
    %p107 = por %p105, %p106
    %p108 = scmp.ne.s32.totalorder %s94, %s95
    %p109 = scmp.eq.s32.totalorder %s21, 1
    %p110 = por %p108, %p109
    %p112 = scmp.ne.s32.totalorder %s95, %s111
    %p113 = scmp.eq.s32.totalorder %s21, 0
    %p114 = por %p112, %p113
    %s116 = sadd.s32 %s115, 1
    %p119 = scmp.eq.s32.totalorder %s15, 1
    %p120 = scmp.ne.s32.totalorder %s115, %s117
    %p121 = scmp.eq.s32.totalorder %s15, 0
    %p122 = por %p120, %p121
    %p123 = scmp.ne.s32.totalorder %s115, %s117
    %p124 = scmp.eq.s32.totalorder %s20, 1
    %p125 = por %p123, %p124
    %p126 = scmp.ne.s32.totalorder %s117, %s118
    %p127 = scmp.eq.s32.totalorder %s20, 0
    %p128 = por %p126, %p127
    %p129 = scmp.ne.s32.totalorder %s117, %s118
    %p130 = scmp.eq.s32.totalorder %s21, 1
    %p131 = por %p129, %p130
    %p133 = scmp.ne.s32.totalorder %s118, %s132
    %p134 = scmp.eq.s32.totalorder %s21, 0
    %p135 = por %p133, %p134
    %s137 = sadd.s32 %s136, 1
    %p140 = scmp.eq.s32.totalorder %s15, 1
    %p141 = scmp.ne.s32.totalorder %s136, %s138
    %p142 = scmp.eq.s32.totalorder %s15, 0
    %p143 = por %p141, %p142
    %p144 = scmp.ne.s32.totalorder %s136, %s138
    %p145 = scmp.eq.s32.totalorder %s20, 1
    %p146 = por %p144, %p145
    %p147 = scmp.ne.s32.totalorder %s138, %s139
    %p148 = scmp.eq.s32.totalorder %s20, 0
    %p149 = por %p147, %p148
    %p150 = scmp.ne.s32.totalorder %s138, %s139
    %p151 = scmp.eq.s32.totalorder %s21, 1
    %p152 = por %p150, %p151
    %p154 = scmp.ne.s32.totalorder %s139, %s153
    %p155 = scmp.eq.s32.totalorder %s21, 0
    %p156 = por %p154, %p155
    %s158 = sadd.s32 %s157, 1
    %p161 = scmp.eq.s32.totalorder %s15, 1
    %p162 = scmp.ne.s32.totalorder %s157, %s159
    %p163 = scmp.eq.s32.totalorder %s15, 0
    %p164 = por %p162, %p163
    %p165 = scmp.ne.s32.totalorder %s157, %s159
    %p166 = scmp.eq.s32.totalorder %s20, 1
    %p167 = por %p165, %p166
    %p168 = scmp.ne.s32.totalorder %s159, %s160
    %p169 = scmp.eq.s32.totalorder %s20, 0
    %p170 = por %p168, %p169
    %p171 = scmp.ne.s32.totalorder %s159, %s160
    %p172 = scmp.eq.s32.totalorder %s21, 1
    %p173 = por %p171, %p172
    %p175 = scmp.ne.s32.totalorder %s160, %s174
    %p176 = scmp.eq.s32.totalorder %s21, 0
    %p177 = por %p175, %p176
    %s178 = ssub.s32 %s22, %s34
    %s179 = ssub.s32 %s23, %s30
    %s180 = sor.u32 %s178, %s179
    %p181 = scmp.eq.s32.totalorder %s180, 0
    %s183 = sadd.s32 %s182, 1
    %s184 = scalar_select %p181, %s182, %s183
    %p187 = pneg %p181
    %p188 = scmp.eq.s32.totalorder %s15, 1
    %p189 = por %p187, %p188
    %p190 = scmp.ne.s32.totalorder %s182, %s185
    %p191 = scmp.eq.s32.totalorder %s15, 0
    %p192 = por %p190, %p191
    %p193 = scmp.ne.s32.totalorder %s182, %s185
    %p194 = scmp.eq.s32.totalorder %s20, 1
    %p195 = por %p193, %p194
    %p196 = scmp.ne.s32.totalorder %s185, %s186
    %p197 = scmp.eq.s32.totalorder %s20, 0
    %p198 = por %p196, %p197
    %p199 = scmp.ne.s32.totalorder %s185, %s186
    %p200 = scmp.eq.s32.totalorder %s21, 1
    %p201 = por %p199, %p200
    %p203 = scmp.ne.s32.totalorder %s186, %s202
    %p204 = scmp.eq.s32.totalorder %s21, 0
    %p205 = por %p203, %p204
    %s206 = sadd.s32 %s22, %s23
    %s207 = sadd.s32 %s34, %s30
    %s208 = ssub.s32 %s206, %s207
    %p209 = scmp.eq.s32.totalorder %s208, 0
    %s211 = sadd.s32 %s210, 1
    %s212 = scalar_select %p209, %s210, %s211
    %p215 = pneg %p209
    %p216 = scmp.eq.s32.totalorder %s15, 1
    %p217 = por %p215, %p216
    %p218 = scmp.ne.s32.totalorder %s210, %s213
    %p219 = scmp.eq.s32.totalorder %s15, 0
    %p220 = por %p218, %p219
    %p221 = scmp.ne.s32.totalorder %s210, %s213
    %p222 = scmp.eq.s32.totalorder %s20, 1
    %p223 = por %p221, %p222
    %p224 = scmp.ne.s32.totalorder %s213, %s214
    %p225 = scmp.eq.s32.totalorder %s20, 0
    %p226 = por %p224, %p225
    %p227 = scmp.ne.s32.totalorder %s213, %s214
    %p228 = scmp.eq.s32.totalorder %s21, 1
    %p229 = por %p227, %p228
    %p231 = scmp.ne.s32.totalorder %s214, %s230
    %p232 = scmp.eq.s32.totalorder %s21, 0
    %p233 = por %p231, %p232
    %s234 = sadd.s32 %s22, %s23
    %s235 = sadd.s32 %s34, %s30
    %s236 = ssub.s32 %s234, %s235
    %p237 = scmp.eq.s32.totalorder %s236, 0
    %s239 = sadd.s32 %s238, 1
    %s240 = scalar_select %p237, %s238, %s239
    %p243 = pneg %p237
    %p244 = scmp.eq.s32.totalorder %s15, 1
    %p245 = por %p243, %p244
    %p246 = scmp.ne.s32.totalorder %s238, %s241
    %p247 = scmp.eq.s32.totalorder %s15, 0
    %p248 = por %p246, %p247
    %p249 = scmp.ne.s32.totalorder %s238, %s241
    %p250 = scmp.eq.s32.totalorder %s20, 1
    %p251 = por %p249, %p250
    %p252 = scmp.ne.s32.totalorder %s241, %s242
    %p253 = scmp.eq.s32.totalorder %s20, 0
    %p254 = por %p252, %p253
    %p255 = scmp.ne.s32.totalorder %s241, %s242
    %p256 = scmp.eq.s32.totalorder %s21, 1
    %p257 = por %p255, %p256
    %p259 = scmp.ne.s32.totalorder %s242, %s258
    %p260 = scmp.eq.s32.totalorder %s21, 0
    %p261 = por %p259, %p260
    %p262 = scmp.le.s32.totalorder 1, %s15
    %p263 = scmp.lt.s32.totalorder %s15, 3
    %p264 = pnand %p262, %p263
    %p265 = pneg %p264
    // Predicated region
    $region9: #{double_conv.4} parent=5 // pred_check
      _
    $region10: #{double_conv.4} parent=5 // pred_check_branch
      %267 = sbr.rel (%p264) target = $region12
    $region11: #{double_conv.4} parent=5 // pred_region
      %s268 = ssub.s32 %s15, 1
      // Predicated region
      $region13: #{double_conv.4} parent=11 // pred_check
        %p269 = pneg %p128
      $region14: #{double_conv.4} parent=11 // pred_check_branch
        %271 = sbr.rel (%p269) target = $region16
      $region15: #{double_conv.4} parent=11 // pred_region
        _
      $region16: #{double_conv.4} parent=11 // pred_fallthru
        _
      // Predicated region
      $region17: #{double_conv.4} parent=11 // pred_check
        %p272 = pneg %p149
      $region18: #{double_conv.4} parent=11 // pred_check_branch
        %274 = sbr.rel (%p272) target = $region20
      $region19: #{double_conv.4} parent=11 // pred_region
        _
      $region20: #{double_conv.4} parent=11 // pred_fallthru
        _
      // Predicated region
      $region21: #{double_conv.4} parent=11 // pred_check
        %p275 = pneg %p170
      $region22: #{double_conv.4} parent=11 // pred_check_branch
        %277 = sbr.rel (%p275) target = $region24
      $region23: #{double_conv.4} parent=11 // pred_region
        _
      $region24: #{double_conv.4} parent=11 // pred_fallthru
        _
    $region12: #{double_conv.4} parent=5 // pred_fallthru
      _
    %p278 = scmp.lt.s32.totalorder %s15, 2
    // Predicated region
    $region25: #{double_conv.4} parent=5 // pred_check
      %p279 = pneg %p278
    $region26: #{double_conv.4} parent=5 // pred_check_branch
      %281 = sbr.rel (%p279) target = $region28
    $region27: #{double_conv.4} parent=5 // pred_region
      // Predicated region
      $region29: #{double_conv.4} parent=27 // pred_check
        %p282 = pneg %p49
      $region30: #{double_conv.4} parent=27 // pred_check_branch
        %284 = sbr.rel (%p282) target = $region32
      $region31: #{double_conv.4} parent=27 // pred_region
        %s285 = smul.u32 2, %s23
        %p286 = scmp.lt.s32.totalorder %s22, 1
        %s287 = scalar_select %p286, %s22, 1
        %p288 = scmp.lt.s32.totalorder %s285, 1
        %s289 = scalar_select %p288, %s285, 1
        %s290 = smul.addr %s287, 2
        %s291 = sadd.s32 %s289, %s290
        %s292 = smul.addr %s291, 4
        %s293 = scalar_lea.vmem %s0, %s292
        %s294 = smul.u32 2, %s23
      $region32: #{double_conv.4} parent=27 // pred_fallthru
        _
      // Predicated region
      $region33: #{double_conv.4} parent=27 // pred_check
        %p295 = pneg %p75
      $region34: #{double_conv.4} parent=27 // pred_check_branch
        %297 = sbr.rel (%p295) target = $region36
      $region35: #{double_conv.4} parent=27 // pred_region
        %p298 = scmp.lt.s32.totalorder %s22, 1
        %s299 = scalar_select %p298, %s22, 1
        %s300 = smul.addr %s299, 2
        %s301 = smul.addr %s300, 4
        %s302 = scalar_lea.vmem %s1, %s301
      $region36: #{double_conv.4} parent=27 // pred_fallthru
        _
      // Predicated region
      $region37: #{double_conv.4} parent=27 // pred_check
        %p303 = pneg %p101
      $region38: #{double_conv.4} parent=27 // pred_check_branch
        %305 = sbr.rel (%p303) target = $region40
      $region39: #{double_conv.4} parent=27 // pred_region
        %p306 = scmp.lt.s32.totalorder %s22, 1
        %s307 = scalar_select %p306, %s22, 1
        %s308 = smul.addr %s307, 2
        %s309 = smul.addr %s308, 4
        %s310 = scalar_lea.vmem %s2, %s309
      $region40: #{double_conv.4} parent=27 // pred_fallthru
        _
    $region28: #{double_conv.4} parent=5 // pred_fallthru
      _
    %p311 = scmp.le.s32.totalorder 1, %s15
    %p312 = scmp.lt.s32.totalorder %s15, 3
    %p313 = pnand %p311, %p312
    %p314 = pneg %p313
    // Predicated region
    $region41: #{double_conv.4} parent=5 // pred_check
      _
    $region42: #{double_conv.4} parent=5 // pred_check_branch
      %316 = sbr.rel (%p313) target = $region44
    $region43: #{double_conv.4} parent=5 // pred_region
      %s317 = ssub.s32 %s15, 1
      %s318 = smul.u32 2, %s25
      %p319 = scmp.lt.s32.totalorder %s24, 1
      %s320 = scalar_select %p319, %s24, 1
      %p321 = scmp.lt.s32.totalorder %s318, 1
      %s322 = scalar_select %p321, %s318, 1
      %s323 = smul.addr %s320, 2
      %s324 = sadd.s32 %s322, %s323
      %s325 = smul.addr %s324, 4
      %s326 = scalar_lea.vmem %s0, %s325
      %p327 = pneg %p55
      %p328 = pneg %p52
      %p329 = scmp.lt.s32.totalorder %s24, 1
      %s330 = scalar_select %p329, %s24, 1
      %s331 = smul.addr %s330, 2
      %s332 = smul.addr %s331, 4
      %s333 = scalar_lea.vmem %s1, %s332
      %p334 = pneg %p81
      %p335 = pneg %p78
      %p336 = scmp.lt.s32.totalorder %s24, 1
      %s337 = scalar_select %p336, %s24, 1
      %s338 = smul.addr %s337, 2
      %s339 = smul.addr %s338, 4
      %s340 = scalar_lea.vmem %s2, %s339
      %p341 = pneg %p107
      %p342 = pneg %p104
      %p343 = pneg %p128
      %p344 = pneg %p125
      %p345 = pneg %p149
      %p346 = pneg %p146
      %p347 = pneg %p170
      %p348 = pneg %p167
      %p349 = pneg %p198
      %p350 = pneg %p195
      %s351 = smul.u32 2, %s25
      %p352 = scmp.lt.s32.totalorder %s24, 1
      %s353 = scalar_select %p352, %s24, 1
      %p354 = scmp.lt.s32.totalorder %s351, 1
      %s355 = scalar_select %p354, %s351, 1
      %s356 = smul.addr %s353, 2
      %s357 = sadd.s32 %s355, %s356
      %s358 = smul.addr %s357, 4
      %s359 = scalar_lea.vmem %s6, %s358
      %p360 = pneg %p226
      %p361 = pneg %p223
      %s362 = sadd.s32 %s24, %s25
      %p363 = scmp.lt.s32.totalorder %s362, 1
      %s364 = scalar_select %p363, %s362, 1
      %s365 = scalar_lea.vmem %s7, %s364
      %p366 = pneg %p254
      %p367 = pneg %p251
      %s368 = sadd.s32 %s24, %s25
      %p369 = scmp.lt.s32.totalorder %s368, 1
      %s370 = scalar_select %p369, %s368, 1
      %s371 = scalar_lea.vmem %s8, %s370
      %s372 = smul.u32 2, %s25
      %p373 = scmp.lt.s32.totalorder %s24, 1
      %s374 = scalar_select %p373, %s24, 1
      %p375 = scmp.lt.s32.totalorder %s372, 1
      %s376 = scalar_select %p375, %s372, 1
      %s377 = smul.addr %s374, 2
      %s378 = sadd.s32 %s376, %s377
      %s379 = smul.addr %s378, 4
      %s380 = scalar_lea.vmem %s0, %s379
      %s381 = smul.u32 2, %s25
      %p382 = scmp.lt.s32.totalorder %s24, 1
      %s383 = scalar_select %p382, %s24, 1
      %s384 = smul.addr %s383, 2
      %s385 = smul.addr %s384, 4
      %s386 = scalar_lea.vmem %s1, %s385
      %p387 = scmp.lt.s32.totalorder %s24, 1
      %s388 = scalar_select %p387, %s24, 1
      %s389 = smul.addr %s388, 2
      %s390 = smul.addr %s389, 4
      %s391 = scalar_lea.vmem %s2, %s390
      %s392 = smul.u32 2, %s25
      %p393 = scmp.lt.s32.totalorder %s24, 1
      %s394 = scalar_select %p393, %s24, 1
      %p395 = scmp.lt.s32.totalorder %s392, 1
      %s396 = scalar_select %p395, %s392, 1
      %s397 = smul.addr %s394, 2
      %s398 = sadd.s32 %s396, %s397
      %s399 = smul.addr %s398, 4
      %s400 = scalar_lea.vmem %s6, %s399
      %s401 = smul.u32 2, %s25
      %s402 = sadd.s32 %s24, %s25
      %p403 = scmp.lt.s32.totalorder %s402, 1
      %s404 = scalar_select %p403, %s402, 1
      %s405 = scalar_lea.vmem %s7, %s404
      %s406 = sadd.s32 %s24, %s25
      %s407 = sadd.s32 %s24, %s25
      %p408 = scmp.lt.s32.totalorder %s407, 1
      %s409 = scalar_select %p408, %s407, 1
      %s410 = scalar_lea.vmem %s8, %s409
      %s411 = sadd.s32 %s24, %s25
      %v413 = vld [vmem:[%s380] sm:$0xf]
      %v414 = vld [vmem:[%s380 + $0x4] sm:$0xf]
      %v415 = vunpack.c.l.bf16 %v413
      %v416 = vunpack.c.l.bf16 %v414
      %v417 = vld [vmem:[%s4] sm:$0x1]
      %v419 = vperm.slane %v417, 0
      %v421 = vmul.f32 %v415, %v419
      %v422 = vmul.f32 %v416, %v419
      %v423 = vld [vmem:[%s5] sm:$0x1]
      %v425 = vperm.slane %v423, 0
      %v427 = vadd.f32 %v421, %v425
      %v428 = vadd.f32 %v422, %v425
      %v429 = vmax.f32 %v427, 0.0
      %v430 = vmax.f32 %v428, 0.0
      %v431 = vpack.c.bf16 %v429, %v429
      %v432 = vpack.c.bf16 %v430, %v430
      %v433 = vld [vmem:[%s386] sm:$0x8]
      %v434 = vunpack.c.l.bf16 %v433
      %v435 = vmul.f32 %v434, %v419
      %v436 = vadd.f32 %v435, %v425
      %v437 = vmax.f32 %v436, 0.0
      %v438 = vpack.c.bf16 %v437, %v437
      %v439 = vld [vmem:[%s391] sm:$0x1]
      %v440 = vunpack.c.l.bf16 %v439
      %v441 = vmul.f32 %v440, %v417
      %v442 = vadd.f32 %v441, %v423
      %v443 = vmax.f32 %v442, 0.0
      %v444 = vpack.c.bf16 %v443, %v443
      %p445 = scmp.gt.s32.totalorder %s25, 0
      %s446 = scalar_select %p445, 1, 0
      %v447 = vstv %s446
      %vm448 = vcmp.eq.s32.totalorder %v447, 1
      %v449 = vsel %vm448, %v438, 0
      %p450 = scmp.lt.s32.totalorder %s25, 0
      %s451 = scalar_select %p450, 1, 0
      %v452 = vstv %s451
      %vm453 = vcmp.eq.s32.totalorder %v452, 1
      %v454 = vsel %vm453, %v444, 0
      %v456 = vunpack.c.l.b16 %v449
      %v457 = vpack.c.b16 %v456, %v456
      %v459 = vshrl.u32 %v457, 16
      %v461 = vrot.slane %v459, 3
      %v465 = vunpack.c.l.b16 %v431
      %v466 = vunpack.c.l.b16 %v432
      %v467 = vpack.c.b16 %v466, %v465
      %v469 = vshrl.u32 %v467, 16
      %v471 = vrot.slane %v469, 7
      %v472 = vshll.u32 %v467, 16
      %v474 = vor.u32 %v471, %v472
      %v478 = vunpack.c.l.b16 %v454
      %v479 = vpack.c.b16 %v478, %v478
      %v481 = vshll.u32 %v479, 16
      %vm484 = vcmask 1040384
      %vm485 = vsmask.f32 256
      %vm486 = vmand %vm484, %vm485
      %v487 = vsel %vm486, %v461, %v474
      %v488 = vsel %vm486, %v471, %v481
      %v489 = vld [vmem:[%s3] sm:$0xf]
      %v490 = vld [vmem:[%s3 + $0x4] sm:$0xf]
      %v491 = vld [vmem:[%s3 + $0x8] sm:$0xf]
      %v492 = vld [vmem:[%s3 + $0xc] sm:$0xf]
      %v493 = vld [vmem:[%s3 + $0x10] sm:$0xf]
      %v494 = vld [vmem:[%s3 + $0x14] sm:$0xf]
      %v495 = vld [vmem:[%s3 + $0x18] sm:$0xf]
      %v496 = vld [vmem:[%s3 + $0x1c] sm:$0xf]
      %v497 = vld [vmem:[%s3 + $0x20] sm:$0xf]
      %v498 = vld [vmem:[%s3 + $0x24] sm:$0xf]
      %v499 = vld [vmem:[%s3 + $0x28] sm:$0xf]
      %v500 = vld [vmem:[%s3 + $0x2c] sm:$0xf]
      %v501 = vld [vmem:[%s3 + $0x30] sm:$0xf]
      %v502 = vld [vmem:[%s3 + $0x34] sm:$0xf]
      %v503 = vld [vmem:[%s3 + $0x38] sm:$0xf]
      %v504 = vld [vmem:[%s3 + $0x3c] sm:$0xf]
      %s505 = scalar_lea.vmem %s3, 64
      %v506 = vld [vmem:[%s505] sm:$0xf]
      %v507 = vld [vmem:[%s505 + $0x4] sm:$0xf]
      %v508 = vld [vmem:[%s505 + $0x8] sm:$0xf]
      %v509 = vld [vmem:[%s505 + $0xc] sm:$0xf]
      %v510 = vld [vmem:[%s505 + $0x10] sm:$0xf]
      %v511 = vld [vmem:[%s505 + $0x14] sm:$0xf]
      %v512 = vld [vmem:[%s505 + $0x18] sm:$0xf]
      %v513 = vld [vmem:[%s505 + $0x1c] sm:$0xf]
      %v514 = vld [vmem:[%s505 + $0x20] sm:$0xf]
      %v515 = vld [vmem:[%s505 + $0x24] sm:$0xf]
      %v516 = vld [vmem:[%s505 + $0x28] sm:$0xf]
      %v517 = vld [vmem:[%s505 + $0x2c] sm:$0xf]
      %v518 = vld [vmem:[%s505 + $0x30] sm:$0xf]
      %v519 = vld [vmem:[%s505 + $0x34] sm:$0xf]
      %v520 = vld [vmem:[%s505 + $0x38] sm:$0xf]
      %v521 = vld [vmem:[%s505 + $0x3c] sm:$0xf]
      %vm522 = vsmask.f32 7424
      %v524 = vshrl.u32 %v487, 16
      %v526 = vshll.u32 %v487, 16
      %v528 = vrot.slane %v526, 1
      %v529 = vor.u32 %v524, %v528
      %v531 = vshll.u32 %v488, 16
      %v533 = vrot.slane %v531, 1
      %v534 = vsel %vm522, %v529, %v533
      %v552 = vunpack.c.l.b16 %v506
      %v553 = vunpack.c.l.b16 %v507
      %v554 = vunpack.c.l.b16 %v508
      %v555 = vunpack.c.l.b16 %v509
      %v556 = vunpack.c.l.b16 %v510
      %v557 = vunpack.c.l.b16 %v511
      %v558 = vunpack.c.l.b16 %v512
      %v559 = vunpack.c.l.b16 %v513
      %v560 = vunpack.c.l.b16 %v514
      %v561 = vunpack.c.l.b16 %v515
      %v562 = vunpack.c.l.b16 %v516
      %v563 = vunpack.c.l.b16 %v517
      %v564 = vunpack.c.l.b16 %v518
      %v565 = vunpack.c.l.b16 %v519
      %v566 = vunpack.c.l.b16 %v520
      %v567 = vunpack.c.l.b16 %v521
      %v568 = vpack.c.b16 %v553, %v552
      %v569 = vpack.c.b16 %v555, %v554
      %v570 = vpack.c.b16 %v557, %v556
      %v571 = vpack.c.b16 %v559, %v558
      %v572 = vpack.c.b16 %v561, %v560
      %v573 = vpack.c.b16 %v563, %v562
      %v574 = vpack.c.b16 %v565, %v564
      %v575 = vpack.c.b16 %v567, %v566
      %584 = vmatpush.bf16.msra.mxu0 %v575
      %585 = vmatpush.bf16.msra.mxu0 %v574
      %586 = vmatpush.bf16.msra.mxu0 %v573
      %587 = vmatpush.bf16.msra.mxu0 %v572
      %588 = vmatpush.bf16.msra.mxu0 %v571
      %589 = vmatpush.bf16.msra.mxu0 %v570
      %590 = vmatpush.bf16.msra.mxu0 %v569
      %591 = vmatpush.bf16.msra.mxu0 %v568
      %592 = vmatmul.bf16.gmra.mxu0 %v534
      %v593 = vpop.f32.mrf.mxu0
      %v594 = vadd.f32 0.0, %v593
      %v595 = vpop.f32.mrf.mxu0
      %v596 = vadd.f32 0.0, %v595
      %597 = vdwg.mxu0
      %v614 = vunpack.c.l.b16 %v489
      %v615 = vunpack.c.l.b16 %v490
      %v616 = vunpack.c.l.b16 %v491
      %v617 = vunpack.c.l.b16 %v492
      %v618 = vunpack.c.l.b16 %v493
      %v619 = vunpack.c.l.b16 %v494
      %v620 = vunpack.c.l.b16 %v495
      %v621 = vunpack.c.l.b16 %v496
      %v622 = vunpack.c.l.b16 %v497
      %v623 = vunpack.c.l.b16 %v498
      %v624 = vunpack.c.l.b16 %v499
      %v625 = vunpack.c.l.b16 %v500
      %v626 = vunpack.c.l.b16 %v501
      %v627 = vunpack.c.l.b16 %v502
      %v628 = vunpack.c.l.b16 %v503
      %v629 = vunpack.c.l.b16 %v504
      %v630 = vpack.c.b16 %v615, %v614
      %v631 = vpack.c.b16 %v617, %v616
      %v632 = vpack.c.b16 %v619, %v618
      %v633 = vpack.c.b16 %v621, %v620
      %v634 = vpack.c.b16 %v623, %v622
      %v635 = vpack.c.b16 %v625, %v624
      %v636 = vpack.c.b16 %v627, %v626
      %v637 = vpack.c.b16 %v629, %v628
      %646 = vmatpush.bf16.msra.mxu0 %v637
      %647 = vmatpush.bf16.msra.mxu0 %v636
      %648 = vmatpush.bf16.msra.mxu0 %v635
      %649 = vmatpush.bf16.msra.mxu0 %v634
      %650 = vmatpush.bf16.msra.mxu0 %v633
      %651 = vmatpush.bf16.msra.mxu0 %v632
      %652 = vmatpush.bf16.msra.mxu0 %v631
      %653 = vmatpush.bf16.msra.mxu0 %v630
      %654 = vmatmul.bf16.gmra.mxu0 %v487
      %v655 = vpop.f32.mrf.mxu0
      %v656 = vadd.f32 %v594, %v655
      %v657 = vpop.f32.mrf.mxu0
      %v658 = vadd.f32 %v596, %v657
      %659 = vdwg.mxu0
      %s660 = scalar_lea.vmem %s3, 128
      %v661 = vld [vmem:[%s660] sm:$0xf]
      %v662 = vld [vmem:[%s660 + $0x4] sm:$0xf]
      %v663 = vld [vmem:[%s660 + $0x8] sm:$0xf]
      %v664 = vld [vmem:[%s660 + $0xc] sm:$0xf]
      %v665 = vld [vmem:[%s660 + $0x10] sm:$0xf]
      %v666 = vld [vmem:[%s660 + $0x14] sm:$0xf]
      %v667 = vld [vmem:[%s660 + $0x18] sm:$0xf]
      %v668 = vld [vmem:[%s660 + $0x1c] sm:$0xf]
      %v669 = vld [vmem:[%s660 + $0x20] sm:$0xf]
      %v670 = vld [vmem:[%s660 + $0x24] sm:$0xf]
      %v671 = vld [vmem:[%s660 + $0x28] sm:$0xf]
      %v672 = vld [vmem:[%s660 + $0x2c] sm:$0xf]
      %v673 = vld [vmem:[%s660 + $0x30] sm:$0xf]
      %v674 = vld [vmem:[%s660 + $0x34] sm:$0xf]
      %v675 = vld [vmem:[%s660 + $0x38] sm:$0xf]
      %v676 = vld [vmem:[%s660 + $0x3c] sm:$0xf]
      %vm679 = vcmask 1046528
      %v680 = vrot.slane %v487, 1
      %v681 = vrot.slane %v488, 1
      %v682 = vsel %vm679, %v680, %v681
      %v700 = vunpack.c.l.b16 %v661
      %v701 = vunpack.c.l.b16 %v662
      %v702 = vunpack.c.l.b16 %v663
      %v703 = vunpack.c.l.b16 %v664
      %v704 = vunpack.c.l.b16 %v665
      %v705 = vunpack.c.l.b16 %v666
      %v706 = vunpack.c.l.b16 %v667
      %v707 = vunpack.c.l.b16 %v668
      %v708 = vunpack.c.l.b16 %v669
      %v709 = vunpack.c.l.b16 %v670
      %v710 = vunpack.c.l.b16 %v671
      %v711 = vunpack.c.l.b16 %v672
      %v712 = vunpack.c.l.b16 %v673
      %v713 = vunpack.c.l.b16 %v674
      %v714 = vunpack.c.l.b16 %v675
      %v715 = vunpack.c.l.b16 %v676
      %v716 = vpack.c.b16 %v701, %v700
      %v717 = vpack.c.b16 %v703, %v702
      %v718 = vpack.c.b16 %v705, %v704
      %v719 = vpack.c.b16 %v707, %v706
      %v720 = vpack.c.b16 %v709, %v708
      %v721 = vpack.c.b16 %v711, %v710
      %v722 = vpack.c.b16 %v713, %v712
      %v723 = vpack.c.b16 %v715, %v714
      %732 = vmatpush.bf16.msra.mxu0 %v723
      %733 = vmatpush.bf16.msra.mxu0 %v722
      %734 = vmatpush.bf16.msra.mxu0 %v721
      %735 = vmatpush.bf16.msra.mxu0 %v720
      %736 = vmatpush.bf16.msra.mxu0 %v719
      %737 = vmatpush.bf16.msra.mxu0 %v718
      %738 = vmatpush.bf16.msra.mxu0 %v717
      %739 = vmatpush.bf16.msra.mxu0 %v716
      %740 = vmatmul.bf16.gmra.mxu0 %v682
      %v741 = vpop.f32.mrf.mxu0
      %v742 = vadd.f32 0.0, %v741
      %v743 = vpop.f32.mrf.mxu0
      %v744 = vadd.f32 0.0, %v743
      %745 = vdwg.mxu0
      %v746 = vadd.f32 %v656, %v742
      %v747 = vadd.f32 %v658, %v744
      %v748 = vadd.f32 %v746, %v747
      %v749 = vrot.slane %v748, 4
      %v750 = vadd.f32 %v748, %v749
      %v751 = vrot.slane %v750, 2
      %v752 = vadd.f32 %v750, %v751
      %v753 = vrot.slane %v752, 1
      %v754 = vadd.f32 %v752, %v753
      %755 = vst [vmem:[%s405] sm:$0x1] %v754
      %v756 = vmul.f32 %v746, %v746
      %v757 = vmul.f32 %v747, %v747
      %v758 = vadd.f32 %v756, %v757
      %v759 = vrot.slane %v758, 4
      %v760 = vadd.f32 %v758, %v759
      %v761 = vrot.slane %v760, 2
      %v762 = vadd.f32 %v760, %v761
      %v763 = vrot.slane %v762, 1
      %v764 = vadd.f32 %v762, %v763
      %765 = vst [vmem:[%s410] sm:$0x1] %v764
      %v766 = vpack.c.bf16 %v746, %v746
      %v767 = vpack.c.bf16 %v747, %v747
      %768 = vst [vmem:[%s400] sm:$0xf] %v766
      %769 = vst [vmem:[%s400 + $0x4] sm:$0xf] %v767
      %s770 = smul.u32 2, %s25
      %p771 = scmp.lt.s32.totalorder %s24, 1
      %s772 = scalar_select %p771, %s24, 1
      %p773 = scmp.lt.s32.totalorder %s770, 1
      %s774 = scalar_select %p773, %s770, 1
      %s775 = smul.addr %s772, 2
      %s776 = sadd.s32 %s774, %s775
      %s777 = smul.addr %s776, 4
      %s778 = scalar_lea.vmem %s6, %s777
      %s779 = sadd.s32 %s24, %s25
      %p780 = scmp.lt.s32.totalorder %s779, 1
      %s781 = scalar_select %p780, %s779, 1
      %s782 = scalar_lea.vmem %s7, %s781
      %s783 = sadd.s32 %s24, %s25
      %p784 = scmp.lt.s32.totalorder %s783, 1
      %s785 = scalar_select %p784, %s783, 1
      %s786 = scalar_lea.vmem %s8, %s785
      // Predicated region
      $region45: #{double_conv.4} parent=43 // pred_check
        %p787 = pneg %p195
      $region46: #{double_conv.4} parent=43 // pred_check_branch
        %789 = sbr.rel (%p787) target = $region48
      $region47: #{double_conv.4} parent=43 // pred_region
        %s790 = smul.u32 2, %s25
      $region48: #{double_conv.4} parent=43 // pred_fallthru
        _
      // Predicated region
      $region49: #{double_conv.4} parent=43 // pred_check
        %p791 = pneg %p223
      $region50: #{double_conv.4} parent=43 // pred_check_branch
        %793 = sbr.rel (%p791) target = $region52
      $region51: #{double_conv.4} parent=43 // pred_region
        %s794 = sadd.s32 %s24, %s25
      $region52: #{double_conv.4} parent=43 // pred_fallthru
        _
      // Predicated region
      $region53: #{double_conv.4} parent=43 // pred_check
        %p795 = pneg %p251
      $region54: #{double_conv.4} parent=43 // pred_check_branch
        %797 = sbr.rel (%p795) target = $region56
      $region55: #{double_conv.4} parent=43 // pred_region
        %s798 = sadd.s32 %s24, %s25
      $region56: #{double_conv.4} parent=43 // pred_fallthru
        _
    $region44: #{double_conv.4} parent=5 // pred_fallthru
      _
    %p799 = scmp.le.s32.totalorder 2, %s15
    // Predicated region
    $region57: #{double_conv.4} parent=5 // pred_check
      %p800 = pneg %p799
    $region58: #{double_conv.4} parent=5 // pred_check_branch
      %802 = sbr.rel (%p800) target = $region60
    $region59: #{double_conv.4} parent=5 // pred_region
      %s803 = ssub.s32 %s15, 2
      // Predicated region
      $region61: #{double_conv.4} parent=59 // pred_check
        %p804 = pneg %p201
      $region62: #{double_conv.4} parent=59 // pred_check_branch
        %806 = sbr.rel (%p804) target = $region64
      $region63: #{double_conv.4} parent=59 // pred_region
        %s807 = smul.u32 2, %s27
        %p808 = scmp.lt.s32.totalorder %s26, 1
        %s809 = scalar_select %p808, %s26, 1
        %p810 = scmp.lt.s32.totalorder %s807, 1
        %s811 = scalar_select %p810, %s807, 1
        %s812 = smul.addr %s809, 2
        %s813 = sadd.s32 %s811, %s812
        %s814 = smul.addr %s813, 4
        %s815 = scalar_lea.vmem %s6, %s814
      $region64: #{double_conv.4} parent=59 // pred_fallthru
        _
      // Predicated region
      $region65: #{double_conv.4} parent=59 // pred_check
        %p816 = pneg %p229
      $region66: #{double_conv.4} parent=59 // pred_check_branch
        %818 = sbr.rel (%p816) target = $region68
      $region67: #{double_conv.4} parent=59 // pred_region
        %s819 = sadd.s32 %s26, %s27
        %p820 = scmp.lt.s32.totalorder %s819, 1
        %s821 = scalar_select %p820, %s819, 1
        %s822 = scalar_lea.vmem %s7, %s821
      $region68: #{double_conv.4} parent=59 // pred_fallthru
        _
      // Predicated region
      $region69: #{double_conv.4} parent=59 // pred_check
        %p823 = pneg %p257
      $region70: #{double_conv.4} parent=59 // pred_check_branch
        %825 = sbr.rel (%p823) target = $region72
      $region71: #{double_conv.4} parent=59 // pred_region
        %s826 = sadd.s32 %s26, %s27
        %p827 = scmp.lt.s32.totalorder %s826, 1
        %s828 = scalar_select %p827, %s826, 1
        %s829 = scalar_lea.vmem %s8, %s828
      $region72: #{double_conv.4} parent=59 // pred_fallthru
        _
    $region60: #{double_conv.4} parent=5 // pred_fallthru
      _
  $region6: #{double_conv.4} parent=0 // loop_footer
    %s19 = sadd.s32 1, %s15
  $region7: #{double_conv.4} parent=0 // loop_footer_branch
    %14 = sbr.rel target = $region3
  $region8: #{double_conv.4} parent=0 // loop_exit
    _

</llo_original>
